<compile_context>
chip_gen: v6e
topology: v6e:2x2x1
jax: 0.10.0
libtpu: 0.0.40
codegen_flags: <defaults>
</compile_context>

<pallas_src>
import numpy as np

import jax
import jax.numpy as jnp
from jax.experimental import pallas as pl
from jax.experimental.pallas import tpu as pltpu  # noqa: F401  (kept for parity with template)


# ------------------------------ the fused kernel -----------------------------
#
# Layouts (B = 2 images, hard-coded):
#   S      (6, 32, 128): S[t, half*16 + b*8 + u, j*4+c] = x[b, c, 4u + 2*half + t, j]
#   T1     (5, 128, 256): conv1 Toeplitz, col = (jo%2)*128 + (jo//2)*8 + co     (co < 6)
#   pool1  (32, 128)    : row 0..15 -> pooled row p = 2u, 16..31 -> p = 2u+1; lane = q*8+c
#   T2     (5, 128, 256): conv2 Toeplitz, col = (qo%2)*128 + (qo//2)*16 + co    (co < 16)
#   pool2  (16, 128)    : row = b*8 + p2 (p2 < 5 valid), lane = q2*16 + co
#   fcin   (2, 640)     : col = p2*128 + q2*16 + co ; fc weights pre-permuted / padded.
def _net_kernel(s_ref, t1_ref, b1_ref, t2_ref, b2_ref,
                wf1_ref, bf1_ref, wf2_ref, bf2_ref, wf3_ref, bf3_ref, o_ref):
    f32 = jnp.float32
    bf16 = jnp.bfloat16

    # ---- conv1 (width taps folded into T1) + 2x2 max pool -------------------
    # acc0 holds the even conv row of every pool pair, acc1 the odd row.
    acc0 = jnp.zeros((32, 256), f32)
    acc1 = jnp.zeros((32, 256), f32)
    for ki in range(5):
        t1k = t1_ref[ki]
        acc0 = acc0 + jnp.dot(s_ref[ki], t1k, preferred_element_type=f32)
        acc1 = acc1 + jnp.dot(s_ref[ki + 1], t1k, preferred_element_type=f32)
    b1 = b1_ref[...]
    f0 = jnp.maximum(acc0 + b1, 0.0)
    f1 = jnp.maximum(acc1 + b1, 0.0)
    gh = jnp.maximum(f0, f1)                                   # height pool (32, 256)
    pool1 = jnp.maximum(gh[:, 0:128], gh[:, 128:256])          # width  pool (32, 128)

    # ---- conv2 (batched over both images) + 2x2 max pool ---------------------
    p1pad = jnp.concatenate([pool1, jnp.zeros((8, 128), f32)], axis=0)   # (40, 128)
    sl = {s: p1pad[s:s + 16, :].astype(bf16) for s in (0, 1, 2, 16, 17, 18)}
    e_starts = (0, 16, 1, 17, 2)        # pooled1 rows 2*p2 + ki     (even conv2 rows)
    o_starts = (16, 1, 17, 2, 18)       # pooled1 rows 2*p2 + 1 + ki (odd  conv2 rows)
    acc2e = jnp.zeros((16, 256), f32)
    acc2o = jnp.zeros((16, 256), f32)
    for ki in range(5):
        t2k = t2_ref[ki]
        acc2e = acc2e + jnp.dot(sl[e_starts[ki]], t2k, preferred_element_type=f32)
        acc2o = acc2o + jnp.dot(sl[o_starts[ki]], t2k, preferred_element_type=f32)
    b2 = b2_ref[...]
    g2 = jnp.maximum(jnp.maximum(acc2e + b2, 0.0), jnp.maximum(acc2o + b2, 0.0))
    pool2 = jnp.maximum(g2[:, 0:128], g2[:, 128:256])          # (16, 128), row = b*8 + p2

    # ---- flatten in vregs + fused MLP (fc1 -> fc2 -> fc3, ReLU after each) ---
    pieces = [jnp.concatenate([pool2[p:p + 1, :], pool2[8 + p:9 + p, :]], axis=0)
              for p in range(5)]                               # 5 x (2, 128)
    fcin = jnp.concatenate(pieces, axis=1).astype(bf16)        # (2, 640)
    h1 = jnp.maximum(jnp.dot(fcin, wf1_ref[...], preferred_element_type=f32)
                     + bf1_ref[...], 0.0)
    h2 = jnp.maximum(jnp.dot(h1.astype(bf16), wf2_ref[...], preferred_element_type=f32)
                     + bf2_ref[...], 0.0)
    h3 = jnp.maximum(jnp.dot(h2.astype(bf16), wf3_ref[...], preferred_element_type=f32)
                     + bf3_ref[...], 0.0)
    o_ref[...] = h3[:, 0:10]


def _fs(shape):
    return pl.BlockSpec(shape, lambda: (0,) * len(shape))


@jax.jit
def net_forward(x, prep):
    # Per-call glue (plain XLA): relayout the 24 KB input and pre-build the six
    # row-shifted conv1 operands, so the kernel never does sublane-offset input slices.
    xt = jnp.transpose(x, (0, 2, 3, 1))                        # (2, 32, 32, 3) NHWC
    xt = jnp.pad(xt, ((0, 0), (0, 0), (0, 0), (0, 1)))         # channel 3 -> 4
    xr = xt.reshape(2, 32, 128)                                # [b, i, j*4 + c]
    u = jnp.arange(8)
    base = jnp.stack([4 * u, 4 * u + 2], axis=0)               # [half, u] -> image-row base
    rows = base[None, :, :] + jnp.arange(6)[:, None, None]     # (6, 2, 8)
    valid = rows < 32
    g = xr[:, jnp.clip(rows, 0, 31), :]                        # (2, 6, 2, 8, 128)
    g = jnp.where(valid[None, :, :, :, None], g, 0.0)
    s = jnp.transpose(g, (1, 2, 0, 3, 4)).reshape(6, 32, 128)  # [t, half*16 + b*8 + u, :]
    s = s.astype(jnp.bfloat16)

    args = (s, prep["t1"], prep["b1r"], prep["t2"], prep["b2r"],
            prep["wf1"], prep["bf1"], prep["wf2"], prep["bf2"],
            prep["wf3"], prep["bf3"])
    return pl.pallas_call(
        _net_kernel,
        out_shape=jax.ShapeDtypeStruct((2, 10), jnp.float32),
        in_specs=[_fs(a.shape) for a in args],
        out_specs=_fs((2, 10)),
    )(*args)


# --------------------- one-time parameter layout preparation -----------------
def prepare_params(params):
    w1 = np.asarray(params["w_conv1"], np.float32); b1 = np.asarray(params["b_conv1"], np.float32)
    w2 = np.asarray(params["w_conv2"], np.float32); b2 = np.asarray(params["b_conv2"], np.float32)
    wf1 = np.asarray(params["w_fc1"], np.float32);  bf1 = np.asarray(params["b_fc1"], np.float32)
    wf2 = np.asarray(params["w_fc2"], np.float32);  bf2 = np.asarray(params["b_fc2"], np.float32)
    wf3 = np.asarray(params["w_fc3"], np.float32);  bf3 = np.asarray(params["b_fc3"], np.float32)

    # conv1 width-Toeplitz per height tap ki, 128-lane-aligned parity split:
    #   T1[ki, j*4+c, col(jo,co)] = w1[co, c, ki, j-jo], col = (jo%2)*128 + (jo//2)*8 + co
    t1 = np.zeros((5, 128, 256), np.float32)
    b1r = np.zeros((1, 256), np.float32)
    for jo in range(28):
        colb = (jo % 2) * 128 + (jo // 2) * 8
        b1r[0, colb:colb + 6] = b1
        for ki in range(5):
            for kj in range(5):
                j = jo + kj
                t1[ki, j * 4:j * 4 + 3, colb:colb + 6] = w1[:, :, ki, kj].T

    # conv2 likewise: T2[ki, q*8+c, col(qo,co)], col = (qo%2)*128 + (qo//2)*16 + co
    t2 = np.zeros((5, 128, 256), np.float32)
    b2r = np.zeros((1, 256), np.float32)
    for qo in range(10):
        colb = (qo % 2) * 128 + (qo // 2) * 16
        b2r[0, colb:colb + 16] = b2
        for ki in range(5):
            for kq in range(5):
                q = qo + kq
                t2[ki, q * 8:q * 8 + 6, colb:colb + 16] = w2[:, :, ki, kq].T

    # fc1: permute its 400 input features from torch order (co*25 + p2*5 + q2) to the
    # in-kernel flatten order (p2*128 + q2*16 + co); pad hidden dims 120/84/10 -> 128.
    wf1p = np.zeros((640, 128), np.float32)
    for p2 in range(5):
        for q2 in range(5):
            for co in range(16):
                wf1p[p2 * 128 + q2 * 16 + co, :120] = wf1[:, co * 25 + p2 * 5 + q2]
    bf1p = np.zeros((1, 128), np.float32); bf1p[0, :120] = bf1
    wf2p = np.zeros((128, 128), np.float32); wf2p[:120, :84] = wf2.T
    bf2p = np.zeros((1, 128), np.float32); bf2p[0, :84] = bf2
    wf3p = np.zeros((128, 128), np.float32); wf3p[:84, :10] = wf3.T
    bf3p = np.zeros((1, 128), np.float32); bf3p[0, :10] = bf3

    bf16 = jnp.bfloat16
    return {"t1": jnp.asarray(t1, bf16), "b1r": jnp.asarray(b1r),
            "t2": jnp.asarray(t2, bf16), "b2r": jnp.asarray(b2r),
            "wf1": jnp.asarray(wf1p, bf16), "bf1": jnp.asarray(bf1p),
            "wf2": jnp.asarray(wf2p, bf16), "bf2": jnp.asarray(bf2p),
            "wf3": jnp.asarray(wf3p, bf16), "bf3": jnp.asarray(bf3p)}


# --------------------------------- init & reference --------------------------
def init_params(key):
    """Deterministic init mimicking PyTorch default U(-1/sqrt(fan_in), 1/sqrt(fan_in))."""
    def uni(k, shape, fan_in):
        bound = 1.0 / jnp.sqrt(float(fan_in))
        return jax.random.uniform(k, shape, jnp.float32, -bound, bound)

    ks = jax.random.split(key, 10)
    return {
        "w_conv1": uni(ks[0], (6, 3, 5, 5), 3 * 5 * 5),
        "b_conv1": uni(ks[1], (6,), 3 * 5 * 5),
        "w_conv2": uni(ks[2], (16, 6, 5, 5), 6 * 5 * 5),
        "b_conv2": uni(ks[3], (16,), 6 * 5 * 5),
        "w_fc1": uni(ks[4], (120, 16 * 5 * 5), 16 * 5 * 5),
        "b_fc1": uni(ks[5], (120,), 16 * 5 * 5),
        "w_fc2": uni(ks[6], (84, 120), 120),
        "b_fc2": uni(ks[7], (84,), 120),
        "w_fc3": uni(ks[8], (10, 84), 84),
        "b_fc3": uni(ks[9], (10,), 84),
    }


def net_forward_ref(x, p):
    """Pure-JAX reference (HIGHEST precision) matching the PyTorch forward exactly,
    including the ReLU after fc3 (as written in the reference module)."""
    hp = jax.lax.Precision.HIGHEST

    def conv(x, w, b):
        y = jax.lax.conv_general_dilated(
            x, w, window_strides=(1, 1), padding="VALID",
            dimension_numbers=("NCHW", "OIHW", "NCHW"), precision=hp)
        return jnp.maximum(y + b[None, :, None, None], 0.0)

    def pool(x):
        B, C, H, W = x.shape
        return x.reshape(B, C, H // 2, 2, W // 2, 2).max(axis=(3, 5))

    h = pool(conv(x, p["w_conv1"], p["b_conv1"]))
    h = pool(conv(h, p["w_conv2"], p["b_conv2"]))
    h = h.reshape(h.shape[0], -1)
    h = jnp.maximum(jnp.dot(h, p["w_fc1"].T, precision=hp) + p["b_fc1"], 0.0)
    h = jnp.maximum(jnp.dot(h, p["w_fc2"].T, precision=hp) + p["b_fc2"], 0.0)
    h = jnp.maximum(jnp.dot(h, p["w_fc3"].T, precision=hp) + p["b_fc3"], 0.0)
    return h


if __name__ == "__main__":
    key = jax.random.PRNGKey(0)
    k_params, k_x = jax.random.split(key)
    params = init_params(k_params)
    prep = prepare_params(params)
    # CIFAR geometry: the fc1 shape (16*5*5) implies 32x32 spatial input, batch 2.
    x = jax.random.normal(k_x, (2, 3, 32, 32), dtype=jnp.float32)

    out = jax.block_until_ready(net_forward(x, prep))
    assert out.shape == (2, 10), out.shape

    ref = net_forward_ref(x, params)
    # bf16 weight storage + bf16 MXU operand passes vs the HIGHEST-precision reference:
    # rounding differences are O(1e-3); real bugs are O(1).
    err = float(jnp.max(jnp.abs(out - ref)))
    assert jnp.allclose(out, ref, atol=1e-2, rtol=1e-2), (
        "mismatch vs reference, max abs diff %e" % err)

    print("KERNEL_OK")
</pallas_src>

<mosaic_0001>
module attributes {stable_mosaic.version = 11 : i64} {
  func.func @_net_kernel(%arg0: memref<6x32x128xbf16, #tpu.memory_space<vmem>>, %arg1: memref<5x128x256xbf16, #tpu.memory_space<vmem>>, %arg2: memref<1x256xf32, #tpu.memory_space<vmem>>, %arg3: memref<5x128x256xbf16, #tpu.memory_space<vmem>>, %arg4: memref<1x256xf32, #tpu.memory_space<vmem>>, %arg5: memref<640x128xbf16, #tpu.memory_space<vmem>>, %arg6: memref<1x128xf32, #tpu.memory_space<vmem>>, %arg7: memref<128x128xbf16, #tpu.memory_space<vmem>>, %arg8: memref<1x128xf32, #tpu.memory_space<vmem>>, %arg9: memref<128x128xbf16, #tpu.memory_space<vmem>>, %arg10: memref<1x128xf32, #tpu.memory_space<vmem>>, %arg11: memref<2x10xf32, #tpu.memory_space<vmem>>) attributes {dimension_semantics = [], scalar_prefetch = 0 : i64, scratch_operands = 0 : i64, tpu.core_type = #tpu.core_type<tc>} {
    %cst = arith.constant 0.000000e+00 : f32
    %0 = vector.broadcast %cst : f32 to vector<32x256xf32>
    %cst_0 = arith.constant 0.000000e+00 : f32
    %1 = vector.broadcast %cst_0 : f32 to vector<32x256xf32>
    %c0 = arith.constant 0 : index
    %c0_1 = arith.constant 0 : index
    %c0_2 = arith.constant 0 : index
    %2 = vector.load %arg1[%c0, %c0_1, %c0_2] : memref<5x128x256xbf16, #tpu.memory_space<vmem>>, vector<1x128x256xbf16>
    %3 = vector.shape_cast %2 : vector<1x128x256xbf16> to vector<128x256xbf16>
    %c0_3 = arith.constant 0 : index
    %c0_4 = arith.constant 0 : index
    %c0_5 = arith.constant 0 : index
    %4 = vector.load %arg0[%c0_3, %c0_4, %c0_5] : memref<6x32x128xbf16, #tpu.memory_space<vmem>>, vector<1x32x128xbf16>
    %5 = vector.shape_cast %4 : vector<1x32x128xbf16> to vector<32x128xbf16>
    %cst_6 = arith.constant dense<0.000000e+00> : vector<32x256xf32>
    %6 = tpu.matmul %5, %3, %cst_6 {dimension_numbers = #tpu.dot_dimension_numbers<[1], [0], [0], [1], [0, 0, 1, 1], [], []>} : vector<32x128xbf16>, vector<128x256xbf16>, vector<32x256xf32> -> vector<32x256xf32>
    %7 = arith.addf %0, %6 : vector<32x256xf32>
    %c1 = arith.constant 1 : index
    %c0_7 = arith.constant 0 : index
    %c0_8 = arith.constant 0 : index
    %8 = vector.load %arg0[%c1, %c0_7, %c0_8] : memref<6x32x128xbf16, #tpu.memory_space<vmem>>, vector<1x32x128xbf16>
    %9 = vector.shape_cast %8 : vector<1x32x128xbf16> to vector<32x128xbf16>
    %cst_9 = arith.constant dense<0.000000e+00> : vector<32x256xf32>
    %10 = tpu.matmul %9, %3, %cst_9 {dimension_numbers = #tpu.dot_dimension_numbers<[1], [0], [0], [1], [0, 0, 1, 1], [], []>} : vector<32x128xbf16>, vector<128x256xbf16>, vector<32x256xf32> -> vector<32x256xf32>
    %11 = arith.addf %1, %10 : vector<32x256xf32>
    %c1_10 = arith.constant 1 : index
    %c0_11 = arith.constant 0 : index
    %c0_12 = arith.constant 0 : index
    %12 = vector.load %arg1[%c1_10, %c0_11, %c0_12] : memref<5x128x256xbf16, #tpu.memory_space<vmem>>, vector<1x128x256xbf16>
    %13 = vector.shape_cast %12 : vector<1x128x256xbf16> to vector<128x256xbf16>
    %c1_13 = arith.constant 1 : index
    %c0_14 = arith.constant 0 : index
    %c0_15 = arith.constant 0 : index
    %14 = vector.load %arg0[%c1_13, %c0_14, %c0_15] : memref<6x32x128xbf16, #tpu.memory_space<vmem>>, vector<1x32x128xbf16>
    %15 = vector.shape_cast %14 : vector<1x32x128xbf16> to vector<32x128xbf16>
    %cst_16 = arith.constant dense<0.000000e+00> : vector<32x256xf32>
    %16 = tpu.matmul %15, %13, %cst_16 {dimension_numbers = #tpu.dot_dimension_numbers<[1], [0], [0], [1], [0, 0, 1, 1], [], []>} : vector<32x128xbf16>, vector<128x256xbf16>, vector<32x256xf32> -> vector<32x256xf32>
    %17 = arith.addf %7, %16 : vector<32x256xf32>
    %c2 = arith.constant 2 : index
    %c0_17 = arith.constant 0 : index
    %c0_18 = arith.constant 0 : index
    %18 = vector.load %arg0[%c2, %c0_17, %c0_18] : memref<6x32x128xbf16, #tpu.memory_space<vmem>>, vector<1x32x128xbf16>
    %19 = vector.shape_cast %18 : vector<1x32x128xbf16> to vector<32x128xbf16>
    %cst_19 = arith.constant dense<0.000000e+00> : vector<32x256xf32>
    %20 = tpu.matmul %19, %13, %cst_19 {dimension_numbers = #tpu.dot_dimension_numbers<[1], [0], [0], [1], [0, 0, 1, 1], [], []>} : vector<32x128xbf16>, vector<128x256xbf16>, vector<32x256xf32> -> vector<32x256xf32>
    %21 = arith.addf %11, %20 : vector<32x256xf32>
    %c2_20 = arith.constant 2 : index
    %c0_21 = arith.constant 0 : index
    %c0_22 = arith.constant 0 : index
    %22 = vector.load %arg1[%c2_20, %c0_21, %c0_22] : memref<5x128x256xbf16, #tpu.memory_space<vmem>>, vector<1x128x256xbf16>
    %23 = vector.shape_cast %22 : vector<1x128x256xbf16> to vector<128x256xbf16>
    %c2_23 = arith.constant 2 : index
    %c0_24 = arith.constant 0 : index
    %c0_25 = arith.constant 0 : index
    %24 = vector.load %arg0[%c2_23, %c0_24, %c0_25] : memref<6x32x128xbf16, #tpu.memory_space<vmem>>, vector<1x32x128xbf16>
    %25 = vector.shape_cast %24 : vector<1x32x128xbf16> to vector<32x128xbf16>
    %cst_26 = arith.constant dense<0.000000e+00> : vector<32x256xf32>
    %26 = tpu.matmul %25, %23, %cst_26 {dimension_numbers = #tpu.dot_dimension_numbers<[1], [0], [0], [1], [0, 0, 1, 1], [], []>} : vector<32x128xbf16>, vector<128x256xbf16>, vector<32x256xf32> -> vector<32x256xf32>
    %27 = arith.addf %17, %26 : vector<32x256xf32>
    %c3 = arith.constant 3 : index
    %c0_27 = arith.constant 0 : index
    %c0_28 = arith.constant 0 : index
    %28 = vector.load %arg0[%c3, %c0_27, %c0_28] : memref<6x32x128xbf16, #tpu.memory_space<vmem>>, vector<1x32x128xbf16>
    %29 = vector.shape_cast %28 : vector<1x32x128xbf16> to vector<32x128xbf16>
    %cst_29 = arith.constant dense<0.000000e+00> : vector<32x256xf32>
    %30 = tpu.matmul %29, %23, %cst_29 {dimension_numbers = #tpu.dot_dimension_numbers<[1], [0], [0], [1], [0, 0, 1, 1], [], []>} : vector<32x128xbf16>, vector<128x256xbf16>, vector<32x256xf32> -> vector<32x256xf32>
    %31 = arith.addf %21, %30 : vector<32x256xf32>
    %c3_30 = arith.constant 3 : index
    %c0_31 = arith.constant 0 : index
    %c0_32 = arith.constant 0 : index
    %32 = vector.load %arg1[%c3_30, %c0_31, %c0_32] : memref<5x128x256xbf16, #tpu.memory_space<vmem>>, vector<1x128x256xbf16>
    %33 = vector.shape_cast %32 : vector<1x128x256xbf16> to vector<128x256xbf16>
    %c3_33 = arith.constant 3 : index
    %c0_34 = arith.constant 0 : index
    %c0_35 = arith.constant 0 : index
    %34 = vector.load %arg0[%c3_33, %c0_34, %c0_35] : memref<6x32x128xbf16, #tpu.memory_space<vmem>>, vector<1x32x128xbf16>
    %35 = vector.shape_cast %34 : vector<1x32x128xbf16> to vector<32x128xbf16>
    %cst_36 = arith.constant dense<0.000000e+00> : vector<32x256xf32>
    %36 = tpu.matmul %35, %33, %cst_36 {dimension_numbers = #tpu.dot_dimension_numbers<[1], [0], [0], [1], [0, 0, 1, 1], [], []>} : vector<32x128xbf16>, vector<128x256xbf16>, vector<32x256xf32> -> vector<32x256xf32>
    %37 = arith.addf %27, %36 : vector<32x256xf32>
    %c4 = arith.constant 4 : index
    %c0_37 = arith.constant 0 : index
    %c0_38 = arith.constant 0 : index
    %38 = vector.load %arg0[%c4, %c0_37, %c0_38] : memref<6x32x128xbf16, #tpu.memory_space<vmem>>, vector<1x32x128xbf16>
    %39 = vector.shape_cast %38 : vector<1x32x128xbf16> to vector<32x128xbf16>
    %cst_39 = arith.constant dense<0.000000e+00> : vector<32x256xf32>
    %40 = tpu.matmul %39, %33, %cst_39 {dimension_numbers = #tpu.dot_dimension_numbers<[1], [0], [0], [1], [0, 0, 1, 1], [], []>} : vector<32x128xbf16>, vector<128x256xbf16>, vector<32x256xf32> -> vector<32x256xf32>
    %41 = arith.addf %31, %40 : vector<32x256xf32>
    %c4_40 = arith.constant 4 : index
    %c0_41 = arith.constant 0 : index
    %c0_42 = arith.constant 0 : index
    %42 = vector.load %arg1[%c4_40, %c0_41, %c0_42] : memref<5x128x256xbf16, #tpu.memory_space<vmem>>, vector<1x128x256xbf16>
    %43 = vector.shape_cast %42 : vector<1x128x256xbf16> to vector<128x256xbf16>
    %c4_43 = arith.constant 4 : index
    %c0_44 = arith.constant 0 : index
    %c0_45 = arith.constant 0 : index
    %44 = vector.load %arg0[%c4_43, %c0_44, %c0_45] : memref<6x32x128xbf16, #tpu.memory_space<vmem>>, vector<1x32x128xbf16>
    %45 = vector.shape_cast %44 : vector<1x32x128xbf16> to vector<32x128xbf16>
    %cst_46 = arith.constant dense<0.000000e+00> : vector<32x256xf32>
    %46 = tpu.matmul %45, %43, %cst_46 {dimension_numbers = #tpu.dot_dimension_numbers<[1], [0], [0], [1], [0, 0, 1, 1], [], []>} : vector<32x128xbf16>, vector<128x256xbf16>, vector<32x256xf32> -> vector<32x256xf32>
    %47 = arith.addf %37, %46 : vector<32x256xf32>
    %c5 = arith.constant 5 : index
    %c0_47 = arith.constant 0 : index
    %c0_48 = arith.constant 0 : index
    %48 = vector.load %arg0[%c5, %c0_47, %c0_48] : memref<6x32x128xbf16, #tpu.memory_space<vmem>>, vector<1x32x128xbf16>
    %49 = vector.shape_cast %48 : vector<1x32x128xbf16> to vector<32x128xbf16>
    %cst_49 = arith.constant dense<0.000000e+00> : vector<32x256xf32>
    %50 = tpu.matmul %49, %43, %cst_49 {dimension_numbers = #tpu.dot_dimension_numbers<[1], [0], [0], [1], [0, 0, 1, 1], [], []>} : vector<32x128xbf16>, vector<128x256xbf16>, vector<32x256xf32> -> vector<32x256xf32>
    %51 = arith.addf %41, %50 : vector<32x256xf32>
    %c0_50 = arith.constant 0 : index
    %c0_51 = arith.constant 0 : index
    %52 = vector.load %arg2[%c0_50, %c0_51] : memref<1x256xf32, #tpu.memory_space<vmem>>, vector<1x256xf32>
    %53 = vector.broadcast %52 : vector<1x256xf32> to vector<32x256xf32>
    %54 = arith.addf %47, %53 : vector<32x256xf32>
    %cst_52 = arith.constant 0.000000e+00 : f32
    %55 = vector.broadcast %cst_52 : f32 to vector<32x256xf32>
    %56 = arith.maximumf %54, %55 : vector<32x256xf32>
    %57 = vector.broadcast %52 : vector<1x256xf32> to vector<32x256xf32>
    %58 = arith.addf %51, %57 : vector<32x256xf32>
    %cst_53 = arith.constant 0.000000e+00 : f32
    %59 = vector.broadcast %cst_53 : f32 to vector<32x256xf32>
    %60 = arith.maximumf %58, %59 : vector<32x256xf32>
    %61 = arith.maximumf %56, %60 : vector<32x256xf32>
    %62 = vector.extract_strided_slice %61 {offsets = [0, 0], sizes = [32, 128], strides = [1, 1]} : vector<32x256xf32> to vector<32x128xf32>
    %63 = vector.extract_strided_slice %61 {offsets = [0, 128], sizes = [32, 128], strides = [1, 1]} : vector<32x256xf32> to vector<32x128xf32>
    %64 = arith.maximumf %62, %63 : vector<32x128xf32>
    %cst_54 = arith.constant 0.000000e+00 : f32
    %65 = vector.broadcast %cst_54 : f32 to vector<8x128xf32>
    %66 = tpu.concatenate %64, %65 in 0 : vector<32x128xf32>, vector<8x128xf32> -> vector<40x128xf32>
    %67 = vector.extract_strided_slice %66 {offsets = [0, 0], sizes = [16, 128], strides = [1, 1]} : vector<40x128xf32> to vector<16x128xf32>
    %68 = arith.truncf %67 : vector<16x128xf32> to vector<16x128xbf16>
    %69 = vector.extract_strided_slice %66 {offsets = [1, 0], sizes = [16, 128], strides = [1, 1]} : vector<40x128xf32> to vector<16x128xf32>
    %70 = arith.truncf %69 : vector<16x128xf32> to vector<16x128xbf16>
    %71 = vector.extract_strided_slice %66 {offsets = [2, 0], sizes = [16, 128], strides = [1, 1]} : vector<40x128xf32> to vector<16x128xf32>
    %72 = arith.truncf %71 : vector<16x128xf32> to vector<16x128xbf16>
    %73 = vector.extract_strided_slice %66 {offsets = [16, 0], sizes = [16, 128], strides = [1, 1]} : vector<40x128xf32> to vector<16x128xf32>
    %74 = arith.truncf %73 : vector<16x128xf32> to vector<16x128xbf16>
    %75 = vector.extract_strided_slice %66 {offsets = [17, 0], sizes = [16, 128], strides = [1, 1]} : vector<40x128xf32> to vector<16x128xf32>
    %76 = arith.truncf %75 : vector<16x128xf32> to vector<16x128xbf16>
    %77 = vector.extract_strided_slice %66 {offsets = [18, 0], sizes = [16, 128], strides = [1, 1]} : vector<40x128xf32> to vector<16x128xf32>
    %78 = arith.truncf %77 : vector<16x128xf32> to vector<16x128xbf16>
    %cst_55 = arith.constant 0.000000e+00 : f32
    %79 = vector.broadcast %cst_55 : f32 to vector<16x256xf32>
    %cst_56 = arith.constant 0.000000e+00 : f32
    %80 = vector.broadcast %cst_56 : f32 to vector<16x256xf32>
    %c0_57 = arith.constant 0 : index
    %c0_58 = arith.constant 0 : index
    %c0_59 = arith.constant 0 : index
    %81 = vector.load %arg3[%c0_57, %c0_58, %c0_59] : memref<5x128x256xbf16, #tpu.memory_space<vmem>>, vector<1x128x256xbf16>
    %82 = vector.shape_cast %81 : vector<1x128x256xbf16> to vector<128x256xbf16>
    %cst_60 = arith.constant dense<0.000000e+00> : vector<16x256xf32>
    %83 = tpu.matmul %68, %82, %cst_60 {dimension_numbers = #tpu.dot_dimension_numbers<[1], [0], [0], [1], [0, 0, 1, 1], [], []>} : vector<16x128xbf16>, vector<128x256xbf16>, vector<16x256xf32> -> vector<16x256xf32>
    %84 = arith.addf %79, %83 : vector<16x256xf32>
    %cst_61 = arith.constant dense<0.000000e+00> : vector<16x256xf32>
    %85 = tpu.matmul %74, %82, %cst_61 {dimension_numbers = #tpu.dot_dimension_numbers<[1], [0], [0], [1], [0, 0, 1, 1], [], []>} : vector<16x128xbf16>, vector<128x256xbf16>, vector<16x256xf32> -> vector<16x256xf32>
    %86 = arith.addf %80, %85 : vector<16x256xf32>
    %c1_62 = arith.constant 1 : index
    %c0_63 = arith.constant 0 : index
    %c0_64 = arith.constant 0 : index
    %87 = vector.load %arg3[%c1_62, %c0_63, %c0_64] : memref<5x128x256xbf16, #tpu.memory_space<vmem>>, vector<1x128x256xbf16>
    %88 = vector.shape_cast %87 : vector<1x128x256xbf16> to vector<128x256xbf16>
    %cst_65 = arith.constant dense<0.000000e+00> : vector<16x256xf32>
    %89 = tpu.matmul %74, %88, %cst_65 {dimension_numbers = #tpu.dot_dimension_numbers<[1], [0], [0], [1], [0, 0, 1, 1], [], []>} : vector<16x128xbf16>, vector<128x256xbf16>, vector<16x256xf32> -> vector<16x256xf32>
    %90 = arith.addf %84, %89 : vector<16x256xf32>
    %cst_66 = arith.constant dense<0.000000e+00> : vector<16x256xf32>
    %91 = tpu.matmul %70, %88, %cst_66 {dimension_numbers = #tpu.dot_dimension_numbers<[1], [0], [0], [1], [0, 0, 1, 1], [], []>} : vector<16x128xbf16>, vector<128x256xbf16>, vector<16x256xf32> -> vector<16x256xf32>
    %92 = arith.addf %86, %91 : vector<16x256xf32>
    %c2_67 = arith.constant 2 : index
    %c0_68 = arith.constant 0 : index
    %c0_69 = arith.constant 0 : index
    %93 = vector.load %arg3[%c2_67, %c0_68, %c0_69] : memref<5x128x256xbf16, #tpu.memory_space<vmem>>, vector<1x128x256xbf16>
    %94 = vector.shape_cast %93 : vector<1x128x256xbf16> to vector<128x256xbf16>
    %cst_70 = arith.constant dense<0.000000e+00> : vector<16x256xf32>
    %95 = tpu.matmul %70, %94, %cst_70 {dimension_numbers = #tpu.dot_dimension_numbers<[1], [0], [0], [1], [0, 0, 1, 1], [], []>} : vector<16x128xbf16>, vector<128x256xbf16>, vector<16x256xf32> -> vector<16x256xf32>
    %96 = arith.addf %90, %95 : vector<16x256xf32>
    %cst_71 = arith.constant dense<0.000000e+00> : vector<16x256xf32>
    %97 = tpu.matmul %76, %94, %cst_71 {dimension_numbers = #tpu.dot_dimension_numbers<[1], [0], [0], [1], [0, 0, 1, 1], [], []>} : vector<16x128xbf16>, vector<128x256xbf16>, vector<16x256xf32> -> vector<16x256xf32>
    %98 = arith.addf %92, %97 : vector<16x256xf32>
    %c3_72 = arith.constant 3 : index
    %c0_73 = arith.constant 0 : index
    %c0_74 = arith.constant 0 : index
    %99 = vector.load %arg3[%c3_72, %c0_73, %c0_74] : memref<5x128x256xbf16, #tpu.memory_space<vmem>>, vector<1x128x256xbf16>
    %100 = vector.shape_cast %99 : vector<1x128x256xbf16> to vector<128x256xbf16>
    %cst_75 = arith.constant dense<0.000000e+00> : vector<16x256xf32>
    %101 = tpu.matmul %76, %100, %cst_75 {dimension_numbers = #tpu.dot_dimension_numbers<[1], [0], [0], [1], [0, 0, 1, 1], [], []>} : vector<16x128xbf16>, vector<128x256xbf16>, vector<16x256xf32> -> vector<16x256xf32>
    %102 = arith.addf %96, %101 : vector<16x256xf32>
    %cst_76 = arith.constant dense<0.000000e+00> : vector<16x256xf32>
    %103 = tpu.matmul %72, %100, %cst_76 {dimension_numbers = #tpu.dot_dimension_numbers<[1], [0], [0], [1], [0, 0, 1, 1], [], []>} : vector<16x128xbf16>, vector<128x256xbf16>, vector<16x256xf32> -> vector<16x256xf32>
    %104 = arith.addf %98, %103 : vector<16x256xf32>
    %c4_77 = arith.constant 4 : index
    %c0_78 = arith.constant 0 : index
    %c0_79 = arith.constant 0 : index
    %105 = vector.load %arg3[%c4_77, %c0_78, %c0_79] : memref<5x128x256xbf16, #tpu.memory_space<vmem>>, vector<1x128x256xbf16>
    %106 = vector.shape_cast %105 : vector<1x128x256xbf16> to vector<128x256xbf16>
    %cst_80 = arith.constant dense<0.000000e+00> : vector<16x256xf32>
    %107 = tpu.matmul %72, %106, %cst_80 {dimension_numbers = #tpu.dot_dimension_numbers<[1], [0], [0], [1], [0, 0, 1, 1], [], []>} : vector<16x128xbf16>, vector<128x256xbf16>, vector<16x256xf32> -> vector<16x256xf32>
    %108 = arith.addf %102, %107 : vector<16x256xf32>
    %cst_81 = arith.constant dense<0.000000e+00> : vector<16x256xf32>
    %109 = tpu.matmul %78, %106, %cst_81 {dimension_numbers = #tpu.dot_dimension_numbers<[1], [0], [0], [1], [0, 0, 1, 1], [], []>} : vector<16x128xbf16>, vector<128x256xbf16>, vector<16x256xf32> -> vector<16x256xf32>
    %110 = arith.addf %104, %109 : vector<16x256xf32>
    %c0_82 = arith.constant 0 : index
    %c0_83 = arith.constant 0 : index
    %111 = vector.load %arg4[%c0_82, %c0_83] : memref<1x256xf32, #tpu.memory_space<vmem>>, vector<1x256xf32>
    %112 = vector.broadcast %111 : vector<1x256xf32> to vector<16x256xf32>
    %113 = arith.addf %108, %112 : vector<16x256xf32>
    %cst_84 = arith.constant 0.000000e+00 : f32
    %114 = vector.broadcast %cst_84 : f32 to vector<16x256xf32>
    %115 = arith.maximumf %113, %114 : vector<16x256xf32>
    %116 = vector.broadcast %111 : vector<1x256xf32> to vector<16x256xf32>
    %117 = arith.addf %110, %116 : vector<16x256xf32>
    %cst_85 = arith.constant 0.000000e+00 : f32
    %118 = vector.broadcast %cst_85 : f32 to vector<16x256xf32>
    %119 = arith.maximumf %117, %118 : vector<16x256xf32>
    %120 = arith.maximumf %115, %119 : vector<16x256xf32>
    %121 = vector.extract_strided_slice %120 {offsets = [0, 0], sizes = [16, 128], strides = [1, 1]} : vector<16x256xf32> to vector<16x128xf32>
    %122 = vector.extract_strided_slice %120 {offsets = [0, 128], sizes = [16, 128], strides = [1, 1]} : vector<16x256xf32> to vector<16x128xf32>
    %123 = arith.maximumf %121, %122 : vector<16x128xf32>
    %124 = vector.extract_strided_slice %123 {offsets = [0, 0], sizes = [1, 128], strides = [1, 1]} : vector<16x128xf32> to vector<1x128xf32>
    %125 = vector.extract_strided_slice %123 {offsets = [8, 0], sizes = [1, 128], strides = [1, 1]} : vector<16x128xf32> to vector<1x128xf32>
    %126 = tpu.concatenate %124, %125 in 0 : vector<1x128xf32>, vector<1x128xf32> -> vector<2x128xf32>
    %127 = vector.extract_strided_slice %123 {offsets = [1, 0], sizes = [1, 128], strides = [1, 1]} : vector<16x128xf32> to vector<1x128xf32>
    %128 = vector.extract_strided_slice %123 {offsets = [9, 0], sizes = [1, 128], strides = [1, 1]} : vector<16x128xf32> to vector<1x128xf32>
    %129 = tpu.concatenate %127, %128 in 0 : vector<1x128xf32>, vector<1x128xf32> -> vector<2x128xf32>
    %130 = vector.extract_strided_slice %123 {offsets = [2, 0], sizes = [1, 128], strides = [1, 1]} : vector<16x128xf32> to vector<1x128xf32>
    %131 = vector.extract_strided_slice %123 {offsets = [10, 0], sizes = [1, 128], strides = [1, 1]} : vector<16x128xf32> to vector<1x128xf32>
    %132 = tpu.concatenate %130, %131 in 0 : vector<1x128xf32>, vector<1x128xf32> -> vector<2x128xf32>
    %133 = vector.extract_strided_slice %123 {offsets = [3, 0], sizes = [1, 128], strides = [1, 1]} : vector<16x128xf32> to vector<1x128xf32>
    %134 = vector.extract_strided_slice %123 {offsets = [11, 0], sizes = [1, 128], strides = [1, 1]} : vector<16x128xf32> to vector<1x128xf32>
    %135 = tpu.concatenate %133, %134 in 0 : vector<1x128xf32>, vector<1x128xf32> -> vector<2x128xf32>
    %136 = vector.extract_strided_slice %123 {offsets = [4, 0], sizes = [1, 128], strides = [1, 1]} : vector<16x128xf32> to vector<1x128xf32>
    %137 = vector.extract_strided_slice %123 {offsets = [12, 0], sizes = [1, 128], strides = [1, 1]} : vector<16x128xf32> to vector<1x128xf32>
    %138 = tpu.concatenate %136, %137 in 0 : vector<1x128xf32>, vector<1x128xf32> -> vector<2x128xf32>
    %139 = tpu.concatenate %126, %129, %132, %135, %138 in 1 : vector<2x128xf32>, vector<2x128xf32>, vector<2x128xf32>, vector<2x128xf32>, vector<2x128xf32> -> vector<2x640xf32>
    %140 = arith.truncf %139 : vector<2x640xf32> to vector<2x640xbf16>
    %c0_86 = arith.constant 0 : index
    %c0_87 = arith.constant 0 : index
    %141 = vector.load %arg5[%c0_86, %c0_87] : memref<640x128xbf16, #tpu.memory_space<vmem>>, vector<640x128xbf16>
    %cst_88 = arith.constant dense<0.000000e+00> : vector<2x128xf32>
    %142 = tpu.matmul %140, %141, %cst_88 {dimension_numbers = #tpu.dot_dimension_numbers<[1], [0], [0], [1], [0, 0, 1, 1], [], []>} : vector<2x640xbf16>, vector<640x128xbf16>, vector<2x128xf32> -> vector<2x128xf32>
    %c0_89 = arith.constant 0 : index
    %c0_90 = arith.constant 0 : index
    %143 = vector.load %arg6[%c0_89, %c0_90] : memref<1x128xf32, #tpu.memory_space<vmem>>, vector<1x128xf32>
    %144 = vector.broadcast %143 : vector<1x128xf32> to vector<2x128xf32>
    %145 = arith.addf %142, %144 : vector<2x128xf32>
    %cst_91 = arith.constant 0.000000e+00 : f32
    %146 = vector.broadcast %cst_91 : f32 to vector<2x128xf32>
    %147 = arith.maximumf %145, %146 : vector<2x128xf32>
    %148 = arith.truncf %147 : vector<2x128xf32> to vector<2x128xbf16>
    %c0_92 = arith.constant 0 : index
    %c0_93 = arith.constant 0 : index
    %149 = vector.load %arg7[%c0_92, %c0_93] : memref<128x128xbf16, #tpu.memory_space<vmem>>, vector<128x128xbf16>
    %cst_94 = arith.constant dense<0.000000e+00> : vector<2x128xf32>
    %150 = tpu.matmul %148, %149, %cst_94 {dimension_numbers = #tpu.dot_dimension_numbers<[1], [0], [0], [1], [0, 0, 1, 1], [], []>} : vector<2x128xbf16>, vector<128x128xbf16>, vector<2x128xf32> -> vector<2x128xf32>
    %c0_95 = arith.constant 0 : index
    %c0_96 = arith.constant 0 : index
    %151 = vector.load %arg8[%c0_95, %c0_96] : memref<1x128xf32, #tpu.memory_space<vmem>>, vector<1x128xf32>
    %152 = vector.broadcast %151 : vector<1x128xf32> to vector<2x128xf32>
    %153 = arith.addf %150, %152 : vector<2x128xf32>
    %cst_97 = arith.constant 0.000000e+00 : f32
    %154 = vector.broadcast %cst_97 : f32 to vector<2x128xf32>
    %155 = arith.maximumf %153, %154 : vector<2x128xf32>
    %156 = arith.truncf %155 : vector<2x128xf32> to vector<2x128xbf16>
    %c0_98 = arith.constant 0 : index
    %c0_99 = arith.constant 0 : index
    %157 = vector.load %arg9[%c0_98, %c0_99] : memref<128x128xbf16, #tpu.memory_space<vmem>>, vector<128x128xbf16>
    %cst_100 = arith.constant dense<0.000000e+00> : vector<2x128xf32>
    %158 = tpu.matmul %156, %157, %cst_100 {dimension_numbers = #tpu.dot_dimension_numbers<[1], [0], [0], [1], [0, 0, 1, 1], [], []>} : vector<2x128xbf16>, vector<128x128xbf16>, vector<2x128xf32> -> vector<2x128xf32>
    %c0_101 = arith.constant 0 : index
    %c0_102 = arith.constant 0 : index
    %159 = vector.load %arg10[%c0_101, %c0_102] : memref<1x128xf32, #tpu.memory_space<vmem>>, vector<1x128xf32>
    %160 = vector.broadcast %159 : vector<1x128xf32> to vector<2x128xf32>
    %161 = arith.addf %158, %160 : vector<2x128xf32>
    %cst_103 = arith.constant 0.000000e+00 : f32
    %162 = vector.broadcast %cst_103 : f32 to vector<2x128xf32>
    %163 = arith.maximumf %161, %162 : vector<2x128xf32>
    %164 = vector.extract_strided_slice %163 {offsets = [0, 0], sizes = [2, 10], strides = [1, 1]} : vector<2x128xf32> to vector<2x10xf32>
    %c0_104 = arith.constant 0 : index
    %c0_105 = arith.constant 0 : index
    %165 = vector.load %arg11[%c0_104, %c0_105] : memref<2x10xf32, #tpu.memory_space<vmem>>, vector<2x10xf32>
    tpu.vector_store %arg11[%c0_104, %c0_105], %164 {strides = array<i32>} : memref<2x10xf32, #tpu.memory_space<vmem>>, vector<2x10xf32>,
    return
  }
}

</mosaic_0001>

<llo_original>
// kernel: net_forward.1
$region0: #{net_forward.1}
  #allocation0 [shape = 'u32[]', space=smem, size = 0x4, offset = 0x4, fixed_abs, tag = 'smem constant byte address 0x4 - core index']
  #allocation1 [shape = 'u32[144,128]{1,0:T(1,128)}', space=vmem, size = 0x12000, scoped, tag = 'internal scratch']
  %s0 = inlined_call_operand.vmem [shape: bf16[6,32,128], index: 0, kind: input, shape index: {}]
  %s1 = inlined_call_operand.vmem [shape: bf16[5,128,256], index: 1, kind: input, shape index: {}]
  %s2 = inlined_call_operand.vmem [shape: f32[1,256], index: 2, kind: input, shape index: {}]
  %s3 = inlined_call_operand.vmem [shape: bf16[5,128,256], index: 3, kind: input, shape index: {}]
  %s4 = inlined_call_operand.vmem [shape: f32[1,256], index: 4, kind: input, shape index: {}]
  %s5 = inlined_call_operand.hbm [shape: bf16[640,128], index: 5, kind: input, shape index: {}]
  %s6 = inlined_call_operand.vmem [shape: f32[1,128], index: 6, kind: input, shape index: {}]
  %s7 = inlined_call_operand.vmem [shape: bf16[128,128], index: 7, kind: input, shape index: {}]
  %s8 = inlined_call_operand.vmem [shape: f32[1,128], index: 8, kind: input, shape index: {}]
  %s9 = inlined_call_operand.vmem [shape: bf16[128,128], index: 9, kind: input, shape index: {}]
  %s10 = inlined_call_operand.vmem [shape: f32[1,128], index: 10, kind: input, shape index: {}]
  %s11 = inlined_call_operand.hbm [shape: f32[2,10], index: 11, kind: output, shape index: {}]
  %s12 = sld [smem:[#allocation0]]
  $region58: #{net_forward.1} parent=0
    _
  %s14 = ssub.s32 1, %s12
  %s15 = scalar_select 0, %s14, %s12
  $region1: #{net_forward.1} parent=0
    #allocation2 [shape = 'u8[163840]{0}', space=vmem, size = 0x28000, scoped, tag = 'input window, operand 5, single buffered']
    #allocation3 [shape = 's32[1]{0}', space=sflag, size = 0x4, scoped, tag = 'scoped memory for net_forward.1']
    #allocation4 [shape = 's32[1]{0}', space=sflag, size = 0x4, scoped, tag = 'scoped memory for net_forward.1']
    #allocation5 [shape = 'u8[1024]{0}', space=vmem, size = 0x400, scoped, tag = 'output window, operand 0, single buffered']
    %16 = vsyncpa [#allocation3], 0
    %17 = vsyncpa [#allocation4], 0
    // Predicated region
    $region2: #{net_forward.1} parent=1 // pred_check
      _
    $region3: #{net_forward.1} parent=1 // pred_check_branch
      %19 = sbr.rel (0) target = $region5
    $region4: #{net_forward.1} parent=1 // pred_region
      _
    $region5: #{net_forward.1} parent=1 // pred_fallthru
      _
    // Predicated region
    $region6: #{net_forward.1} parent=1 // pred_check
      _
    $region7: #{net_forward.1} parent=1 // pred_check_branch
      %21 = sbr.rel (0) target = $region9
    $region8: #{net_forward.1} parent=1 // pred_region
      _
    $region9: #{net_forward.1} parent=1 // pred_fallthru
      _
    // Predicated region
    $region10: #{net_forward.1} parent=1 // pred_check
      _
    $region11: #{net_forward.1} parent=1 // pred_check_branch
      %23 = sbr.rel (0) target = $region13
    $region12: #{net_forward.1} parent=1 // pred_region
      _
    $region13: #{net_forward.1} parent=1 // pred_fallthru
      _
    // Predicated region
    $region14: #{net_forward.1} parent=1 // pred_check
      _
    $region15: #{net_forward.1} parent=1 // pred_check_branch
      %25 = sbr.rel (0) target = $region17
    $region16: #{net_forward.1} parent=1 // pred_region
      _
    $region17: #{net_forward.1} parent=1 // pred_fallthru
      _
    // Predicated region
    $region18: #{net_forward.1} parent=1 // pred_check
      _
    $region19: #{net_forward.1} parent=1 // pred_check_branch
      %27 = sbr.rel (0) target = $region21
    $region20: #{net_forward.1} parent=1 // pred_region
      _
    $region21: #{net_forward.1} parent=1 // pred_fallthru
      _
    // Predicated region
    $region22: #{net_forward.1} parent=1 // pred_check
      _
    $region23: #{net_forward.1} parent=1 // pred_check_branch
      %29 = sbr.rel (0) target = $region25
    $region24: #{net_forward.1} parent=1 // pred_region
      %s31 = ssub.s32 5120, 5120
      %32 = vsyncadd [#allocation3], %s31
      %s33 = sshll.u32 [#allocation2], 4
      %s34 = int_to_ptr.vmem [resolvable:$true] %s33
      %39 = dma.hbm_to_vmem [thread:$0]  %s5, 5120, %s34, [#allocation3], 64, 64, 4
    $region25: #{net_forward.1} parent=1 // pred_fallthru
      _
    // Predicated region
    $region26: #{net_forward.1} parent=1 // pred_check
      _
    $region27: #{net_forward.1} parent=1 // pred_check_branch
      %41 = sbr.rel (0) target = $region29
    $region28: #{net_forward.1} parent=1 // pred_region
      _
    $region29: #{net_forward.1} parent=1 // pred_fallthru
      _
    // Predicated region
    $region30: #{net_forward.1} parent=1 // pred_check
      _
    $region31: #{net_forward.1} parent=1 // pred_check_branch
      %43 = sbr.rel (0) target = $region33
    $region32: #{net_forward.1} parent=1 // pred_region
      _
    $region33: #{net_forward.1} parent=1 // pred_fallthru
      _
    // Predicated region
    $region34: #{net_forward.1} parent=1 // pred_check
      _
    $region35: #{net_forward.1} parent=1 // pred_check_branch
      %45 = sbr.rel (0) target = $region37
    $region36: #{net_forward.1} parent=1 // pred_region
      _
    $region37: #{net_forward.1} parent=1 // pred_fallthru
      _
    // Predicated region
    $region38: #{net_forward.1} parent=1 // pred_check
      _
    $region39: #{net_forward.1} parent=1 // pred_check_branch
      %47 = sbr.rel (0) target = $region41
    $region40: #{net_forward.1} parent=1 // pred_region
      _
    $region41: #{net_forward.1} parent=1 // pred_fallthru
      _
    // Predicated region
    $region42: #{net_forward.1} parent=1 // pred_check
      _
    $region43: #{net_forward.1} parent=1 // pred_check_branch
      %49 = sbr.rel (0) target = $region45
    $region44: #{net_forward.1} parent=1 // pred_region
      _
    $region45: #{net_forward.1} parent=1 // pred_fallthru
      _
    // Predicated region
    $region46: #{net_forward.1} parent=1 // pred_check
      _
    $region47: #{net_forward.1} parent=1 // pred_check_branch
      %51 = sbr.rel (0) target = $region49
    $region48: #{net_forward.1} parent=1 // pred_region
      %52 = dma.done [#allocation3], 5120
    $region49: #{net_forward.1} parent=1 // pred_fallthru
      _
    %v54 = vld [vmem:[%s1] sm:$0xff]
    %v55 = vld [vmem:[%s1 + $0x8] sm:$0xff]
    %v56 = vld [vmem:[%s1 + $0x10] sm:$0xff]
    %v57 = vld [vmem:[%s1 + $0x18] sm:$0xff]
    %v58 = vld [vmem:[%s1 + $0x20] sm:$0xff]
    %v59 = vld [vmem:[%s1 + $0x28] sm:$0xff]
    %v60 = vld [vmem:[%s1 + $0x30] sm:$0xff]
    %v61 = vld [vmem:[%s1 + $0x38] sm:$0xff]
    %v62 = vld [vmem:[%s1 + $0x40] sm:$0xff]
    %v63 = vld [vmem:[%s1 + $0x48] sm:$0xff]
    %v64 = vld [vmem:[%s1 + $0x50] sm:$0xff]
    %v65 = vld [vmem:[%s1 + $0x58] sm:$0xff]
    %v66 = vld [vmem:[%s1 + $0x60] sm:$0xff]
    %v67 = vld [vmem:[%s1 + $0x68] sm:$0xff]
    %v68 = vld [vmem:[%s1 + $0x70] sm:$0xff]
    %v69 = vld [vmem:[%s1 + $0x78] sm:$0xff]
    %v70 = vld [vmem:[%s0] sm:$0xf]
    %v71 = vld [vmem:[%s0 + $0x4] sm:$0xf]
    %v72 = vld [vmem:[%s0 + $0x8] sm:$0xf]
    %v73 = vld [vmem:[%s0 + $0xc] sm:$0xf]
    %s74 = scalar_lea.vmem %s0, 16
    %v75 = vld [vmem:[%s74] sm:$0xf]
    %v76 = vld [vmem:[%s74 + $0x4] sm:$0xf]
    %v77 = vld [vmem:[%s74 + $0x8] sm:$0xf]
    %v78 = vld [vmem:[%s74 + $0xc] sm:$0xf]
    %s79 = scalar_lea.vmem %s1, 128
    %v80 = vld [vmem:[%s79] sm:$0xff]
    %v81 = vld [vmem:[%s79 + $0x8] sm:$0xff]
    %v82 = vld [vmem:[%s79 + $0x10] sm:$0xff]
    %v83 = vld [vmem:[%s79 + $0x18] sm:$0xff]
    %v84 = vld [vmem:[%s79 + $0x20] sm:$0xff]
    %v85 = vld [vmem:[%s79 + $0x28] sm:$0xff]
    %v86 = vld [vmem:[%s79 + $0x30] sm:$0xff]
    %v87 = vld [vmem:[%s79 + $0x38] sm:$0xff]
    %v88 = vld [vmem:[%s79 + $0x40] sm:$0xff]
    %v89 = vld [vmem:[%s79 + $0x48] sm:$0xff]
    %v90 = vld [vmem:[%s79 + $0x50] sm:$0xff]
    %v91 = vld [vmem:[%s79 + $0x58] sm:$0xff]
    %v92 = vld [vmem:[%s79 + $0x60] sm:$0xff]
    %v93 = vld [vmem:[%s79 + $0x68] sm:$0xff]
    %v94 = vld [vmem:[%s79 + $0x70] sm:$0xff]
    %v95 = vld [vmem:[%s79 + $0x78] sm:$0xff]
    %v100 = vunpack.c.l.b16 %v75
    %v101 = vunpack.c.l.b16 %v76
    %v102 = vunpack.c.l.b16 %v77
    %v103 = vunpack.c.l.b16 %v78
    %v104 = vpack.c.b16 %v101, %v100
    %v105 = vpack.c.b16 %v103, %v102
    %v124 = vunpack.c.l.b16 %v80
    %v125 = vunpack.c.h.b16 %v80
    %v126 = vunpack.c.l.b16 %v81
    %v127 = vunpack.c.h.b16 %v81
    %v128 = vunpack.c.l.b16 %v82
    %v129 = vunpack.c.h.b16 %v82
    %v130 = vunpack.c.l.b16 %v83
    %v131 = vunpack.c.h.b16 %v83
    %v132 = vunpack.c.l.b16 %v84
    %v133 = vunpack.c.h.b16 %v84
    %v134 = vunpack.c.l.b16 %v85
    %v135 = vunpack.c.h.b16 %v85
    %v136 = vunpack.c.l.b16 %v86
    %v137 = vunpack.c.h.b16 %v86
    %v138 = vunpack.c.l.b16 %v87
    %v139 = vunpack.c.h.b16 %v87
    %v140 = vunpack.c.l.b16 %v88
    %v141 = vunpack.c.h.b16 %v88
    %v142 = vunpack.c.l.b16 %v89
    %v143 = vunpack.c.h.b16 %v89
    %v144 = vunpack.c.l.b16 %v90
    %v145 = vunpack.c.h.b16 %v90
    %v146 = vunpack.c.l.b16 %v91
    %v147 = vunpack.c.h.b16 %v91
    %v148 = vunpack.c.l.b16 %v92
    %v149 = vunpack.c.h.b16 %v92
    %v150 = vunpack.c.l.b16 %v93
    %v151 = vunpack.c.h.b16 %v93
    %v152 = vunpack.c.l.b16 %v94
    %v153 = vunpack.c.h.b16 %v94
    %v154 = vunpack.c.l.b16 %v95
    %v155 = vunpack.c.h.b16 %v95
    %v156 = vpack.c.b16 %v126, %v124
    %v157 = vpack.c.b16 %v127, %v125
    %v158 = vpack.c.b16 %v130, %v128
    %v159 = vpack.c.b16 %v131, %v129
    %v160 = vpack.c.b16 %v134, %v132
    %v161 = vpack.c.b16 %v135, %v133
    %v162 = vpack.c.b16 %v138, %v136
    %v163 = vpack.c.b16 %v139, %v137
    %v164 = vpack.c.b16 %v142, %v140
    %v165 = vpack.c.b16 %v143, %v141
    %v166 = vpack.c.b16 %v146, %v144
    %v167 = vpack.c.b16 %v147, %v145
    %v168 = vpack.c.b16 %v150, %v148
    %v169 = vpack.c.b16 %v151, %v149
    %v170 = vpack.c.b16 %v154, %v152
    %v171 = vpack.c.b16 %v155, %v153
    %188 = vmatprep.subr.bf16.mxu0 %v171
    %189 = vmatpush1.bf16.msra.mxu0 %v170
    %190 = vmatprep.subr.bf16.mxu0 %v169
    %191 = vmatpush1.bf16.msra.mxu0 %v168
    %192 = vmatprep.subr.bf16.mxu0 %v167
    %193 = vmatpush1.bf16.msra.mxu0 %v166
    %194 = vmatprep.subr.bf16.mxu0 %v165
    %195 = vmatpush1.bf16.msra.mxu0 %v164
    %196 = vmatprep.subr.bf16.mxu0 %v163
    %197 = vmatpush1.bf16.msra.mxu0 %v162
    %198 = vmatprep.subr.bf16.mxu0 %v161
    %199 = vmatpush1.bf16.msra.mxu0 %v160
    %200 = vmatprep.subr.bf16.mxu0 %v159
    %201 = vmatpush1.bf16.msra.mxu0 %v158
    %202 = vmatprep.subr.bf16.mxu0 %v157
    %203 = vmatpush1.bf16.msra.mxu0 %v156
    %204 = vmatprep.subr.bf16.mxu0 0
    %205 = vmatpush2.bf16.msra.mxu0 0
    %206 = vmatprep.subr.bf16.mxu0 0
    %207 = vmatpush2.bf16.msra.mxu0 0
    %208 = vmatprep.subr.bf16.mxu0 0
    %209 = vmatpush2.bf16.msra.mxu0 0
    %210 = vmatprep.subr.bf16.mxu0 0
    %211 = vmatpush2.bf16.msra.mxu0 0
    %212 = vmatprep.subr.bf16.mxu0 0
    %213 = vmatpush2.bf16.msra.mxu0 0
    %214 = vmatprep.subr.bf16.mxu0 0
    %215 = vmatpush2.bf16.msra.mxu0 0
    %216 = vmatprep.subr.bf16.mxu0 0
    %217 = vmatpush2.bf16.msra.mxu0 0
    %218 = vmatprep.subr.bf16.mxu0 0
    %219 = vmatpush2.bf16.msra.mxu0 0
    %220 = vmatprep.mubr.bf16.mxu0 0
    %221 = vmatmul.mubr.bf16.gmra.mxu0 %v104
    %v222 = vpop.f32.mrf.mxu0
    %v223 = vadd.f32 0.0, %v222
    %v224 = vpop.f32.mrf.mxu0
    %v225 = vadd.f32 0.0, %v224
    %v226 = vpop.f32.mrf.mxu0
    %v227 = vadd.f32 0.0, %v226
    %v228 = vpop.f32.mrf.mxu0
    %v229 = vadd.f32 0.0, %v228
    %230 = vmatprep.mubr.bf16.mxu0 0
    %231 = vmatmul.mubr.bf16.gmra.mxu0 %v105
    %v232 = vpop.f32.mrf.mxu0
    %v233 = vadd.f32 0.0, %v232
    %v234 = vpop.f32.mrf.mxu0
    %v235 = vadd.f32 0.0, %v234
    %v236 = vpop.f32.mrf.mxu0
    %v237 = vadd.f32 0.0, %v236
    %v238 = vpop.f32.mrf.mxu0
    %v239 = vadd.f32 0.0, %v238
    %240 = vdwg.mxu0
    %v245 = vunpack.c.l.b16 %v70
    %v246 = vunpack.c.l.b16 %v71
    %v247 = vunpack.c.l.b16 %v72
    %v248 = vunpack.c.l.b16 %v73
    %v249 = vpack.c.b16 %v246, %v245
    %v250 = vpack.c.b16 %v248, %v247
    %v269 = vunpack.c.l.b16 %v54
    %v270 = vunpack.c.h.b16 %v54
    %v271 = vunpack.c.l.b16 %v55
    %v272 = vunpack.c.h.b16 %v55
    %v273 = vunpack.c.l.b16 %v56
    %v274 = vunpack.c.h.b16 %v56
    %v275 = vunpack.c.l.b16 %v57
    %v276 = vunpack.c.h.b16 %v57
    %v277 = vunpack.c.l.b16 %v58
    %v278 = vunpack.c.h.b16 %v58
    %v279 = vunpack.c.l.b16 %v59
    %v280 = vunpack.c.h.b16 %v59
    %v281 = vunpack.c.l.b16 %v60
    %v282 = vunpack.c.h.b16 %v60
    %v283 = vunpack.c.l.b16 %v61
    %v284 = vunpack.c.h.b16 %v61
    %v285 = vunpack.c.l.b16 %v62
    %v286 = vunpack.c.h.b16 %v62
    %v287 = vunpack.c.l.b16 %v63
    %v288 = vunpack.c.h.b16 %v63
    %v289 = vunpack.c.l.b16 %v64
    %v290 = vunpack.c.h.b16 %v64
    %v291 = vunpack.c.l.b16 %v65
    %v292 = vunpack.c.h.b16 %v65
    %v293 = vunpack.c.l.b16 %v66
    %v294 = vunpack.c.h.b16 %v66
    %v295 = vunpack.c.l.b16 %v67
    %v296 = vunpack.c.h.b16 %v67
    %v297 = vunpack.c.l.b16 %v68
    %v298 = vunpack.c.h.b16 %v68
    %v299 = vunpack.c.l.b16 %v69
    %v300 = vunpack.c.h.b16 %v69
    %v301 = vpack.c.b16 %v271, %v269
    %v302 = vpack.c.b16 %v272, %v270
    %v303 = vpack.c.b16 %v275, %v273
    %v304 = vpack.c.b16 %v276, %v274
    %v305 = vpack.c.b16 %v279, %v277
    %v306 = vpack.c.b16 %v280, %v278
    %v307 = vpack.c.b16 %v283, %v281
    %v308 = vpack.c.b16 %v284, %v282
    %v309 = vpack.c.b16 %v287, %v285
    %v310 = vpack.c.b16 %v288, %v286
    %v311 = vpack.c.b16 %v291, %v289
    %v312 = vpack.c.b16 %v292, %v290
    %v313 = vpack.c.b16 %v295, %v293
    %v314 = vpack.c.b16 %v296, %v294
    %v315 = vpack.c.b16 %v299, %v297
    %v316 = vpack.c.b16 %v300, %v298
    %333 = vmatprep.subr.bf16.mxu0 %v316
    %334 = vmatpush1.bf16.msra.mxu0 %v315
    %335 = vmatprep.subr.bf16.mxu0 %v314
    %336 = vmatpush1.bf16.msra.mxu0 %v313
    %337 = vmatprep.subr.bf16.mxu0 %v312
    %338 = vmatpush1.bf16.msra.mxu0 %v311
    %339 = vmatprep.subr.bf16.mxu0 %v310
    %340 = vmatpush1.bf16.msra.mxu0 %v309
    %341 = vmatprep.subr.bf16.mxu0 %v308
    %342 = vmatpush1.bf16.msra.mxu0 %v307
    %343 = vmatprep.subr.bf16.mxu0 %v306
    %344 = vmatpush1.bf16.msra.mxu0 %v305
    %345 = vmatprep.subr.bf16.mxu0 %v304
    %346 = vmatpush1.bf16.msra.mxu0 %v303
    %347 = vmatprep.subr.bf16.mxu0 %v302
    %348 = vmatpush1.bf16.msra.mxu0 %v301
    %349 = vmatprep.subr.bf16.mxu0 0
    %350 = vmatpush2.bf16.msra.mxu0 0
    %351 = vmatprep.subr.bf16.mxu0 0
    %352 = vmatpush2.bf16.msra.mxu0 0
    %353 = vmatprep.subr.bf16.mxu0 0
    %354 = vmatpush2.bf16.msra.mxu0 0
    %355 = vmatprep.subr.bf16.mxu0 0
    %356 = vmatpush2.bf16.msra.mxu0 0
    %357 = vmatprep.subr.bf16.mxu0 0
    %358 = vmatpush2.bf16.msra.mxu0 0
    %359 = vmatprep.subr.bf16.mxu0 0
    %360 = vmatpush2.bf16.msra.mxu0 0
    %361 = vmatprep.subr.bf16.mxu0 0
    %362 = vmatpush2.bf16.msra.mxu0 0
    %363 = vmatprep.subr.bf16.mxu0 0
    %364 = vmatpush2.bf16.msra.mxu0 0
    %365 = vmatprep.mubr.bf16.mxu0 0
    %366 = vmatmul.mubr.bf16.gmra.mxu0 %v249
    %v367 = vpop.f32.mrf.mxu0
    %v368 = vadd.f32 %v223, %v367
    %v369 = vpop.f32.mrf.mxu0
    %v370 = vadd.f32 %v225, %v369
    %v371 = vpop.f32.mrf.mxu0
    %v372 = vadd.f32 %v227, %v371
    %v373 = vpop.f32.mrf.mxu0
    %v374 = vadd.f32 %v229, %v373
    %375 = vmatprep.mubr.bf16.mxu0 0
    %376 = vmatmul.mubr.bf16.gmra.mxu0 %v250
    %v377 = vpop.f32.mrf.mxu0
    %v378 = vadd.f32 %v233, %v377
    %v379 = vpop.f32.mrf.mxu0
    %v380 = vadd.f32 %v235, %v379
    %v381 = vpop.f32.mrf.mxu0
    %v382 = vadd.f32 %v237, %v381
    %v383 = vpop.f32.mrf.mxu0
    %v384 = vadd.f32 %v239, %v383
    %385 = vdwg.mxu0
    %s386 = scalar_lea.vmem %s0, 32
    %v387 = vld [vmem:[%s386] sm:$0xf]
    %v388 = vld [vmem:[%s386 + $0x4] sm:$0xf]
    %v389 = vld [vmem:[%s386 + $0x8] sm:$0xf]
    %v390 = vld [vmem:[%s386 + $0xc] sm:$0xf]
    %v395 = vunpack.c.l.b16 %v387
    %v396 = vunpack.c.l.b16 %v388
    %v397 = vunpack.c.l.b16 %v389
    %v398 = vunpack.c.l.b16 %v390
    %v399 = vpack.c.b16 %v396, %v395
    %v400 = vpack.c.b16 %v398, %v397
    %403 = vmatprep.subr.bf16.mxu0 %v171
    %404 = vmatpush1.bf16.msra.mxu0 %v170
    %405 = vmatprep.subr.bf16.mxu0 %v169
    %406 = vmatpush1.bf16.msra.mxu0 %v168
    %407 = vmatprep.subr.bf16.mxu0 %v167
    %408 = vmatpush1.bf16.msra.mxu0 %v166
    %409 = vmatprep.subr.bf16.mxu0 %v165
    %410 = vmatpush1.bf16.msra.mxu0 %v164
    %411 = vmatprep.subr.bf16.mxu0 %v163
    %412 = vmatpush1.bf16.msra.mxu0 %v162
    %413 = vmatprep.subr.bf16.mxu0 %v161
    %414 = vmatpush1.bf16.msra.mxu0 %v160
    %415 = vmatprep.subr.bf16.mxu0 %v159
    %416 = vmatpush1.bf16.msra.mxu0 %v158
    %417 = vmatprep.subr.bf16.mxu0 %v157
    %418 = vmatpush1.bf16.msra.mxu0 %v156
    %419 = vmatprep.subr.bf16.mxu0 0
    %420 = vmatpush2.bf16.msra.mxu0 0
    %421 = vmatprep.subr.bf16.mxu0 0
    %422 = vmatpush2.bf16.msra.mxu0 0
    %423 = vmatprep.subr.bf16.mxu0 0
    %424 = vmatpush2.bf16.msra.mxu0 0
    %425 = vmatprep.subr.bf16.mxu0 0
    %426 = vmatpush2.bf16.msra.mxu0 0
    %427 = vmatprep.subr.bf16.mxu0 0
    %428 = vmatpush2.bf16.msra.mxu0 0
    %429 = vmatprep.subr.bf16.mxu0 0
    %430 = vmatpush2.bf16.msra.mxu0 0
    %431 = vmatprep.subr.bf16.mxu0 0
    %432 = vmatpush2.bf16.msra.mxu0 0
    %433 = vmatprep.subr.bf16.mxu0 0
    %434 = vmatpush2.bf16.msra.mxu0 0
    %435 = vmatprep.mubr.bf16.mxu0 0
    %436 = vmatmul.mubr.bf16.gmra.mxu0 %v399
    %v437 = vpop.f32.mrf.mxu0
    %v438 = vadd.f32 0.0, %v437
    %v439 = vpop.f32.mrf.mxu0
    %v440 = vadd.f32 0.0, %v439
    %v441 = vpop.f32.mrf.mxu0
    %v442 = vadd.f32 0.0, %v441
    %v443 = vpop.f32.mrf.mxu0
    %v444 = vadd.f32 0.0, %v443
    %445 = vmatprep.mubr.bf16.mxu0 0
    %446 = vmatmul.mubr.bf16.gmra.mxu0 %v400
    %v447 = vpop.f32.mrf.mxu0
    %v448 = vadd.f32 0.0, %v447
    %v449 = vpop.f32.mrf.mxu0
    %v450 = vadd.f32 0.0, %v449
    %v451 = vpop.f32.mrf.mxu0
    %v452 = vadd.f32 0.0, %v451
    %v453 = vpop.f32.mrf.mxu0
    %v454 = vadd.f32 0.0, %v453
    %455 = vdwg.mxu0
    %456 = vmatprep.subr.bf16.mxu0 %v316
    %457 = vmatpush1.bf16.msra.mxu0 %v315
    %458 = vmatprep.subr.bf16.mxu0 %v314
    %459 = vmatpush1.bf16.msra.mxu0 %v313
    %460 = vmatprep.subr.bf16.mxu0 %v312
    %461 = vmatpush1.bf16.msra.mxu0 %v311
    %462 = vmatprep.subr.bf16.mxu0 %v310
    %463 = vmatpush1.bf16.msra.mxu0 %v309
    %464 = vmatprep.subr.bf16.mxu0 %v308
    %465 = vmatpush1.bf16.msra.mxu0 %v307
    %466 = vmatprep.subr.bf16.mxu0 %v306
    %467 = vmatpush1.bf16.msra.mxu0 %v305
    %468 = vmatprep.subr.bf16.mxu0 %v304
    %469 = vmatpush1.bf16.msra.mxu0 %v303
    %470 = vmatprep.subr.bf16.mxu0 %v302
    %471 = vmatpush1.bf16.msra.mxu0 %v301
    %472 = vmatprep.subr.bf16.mxu0 0
    %473 = vmatpush2.bf16.msra.mxu0 0
    %474 = vmatprep.subr.bf16.mxu0 0
    %475 = vmatpush2.bf16.msra.mxu0 0
    %476 = vmatprep.subr.bf16.mxu0 0
    %477 = vmatpush2.bf16.msra.mxu0 0
    %478 = vmatprep.subr.bf16.mxu0 0
    %479 = vmatpush2.bf16.msra.mxu0 0
    %480 = vmatprep.subr.bf16.mxu0 0
    %481 = vmatpush2.bf16.msra.mxu0 0
    %482 = vmatprep.subr.bf16.mxu0 0
    %483 = vmatpush2.bf16.msra.mxu0 0
    %484 = vmatprep.subr.bf16.mxu0 0
    %485 = vmatpush2.bf16.msra.mxu0 0
    %486 = vmatprep.subr.bf16.mxu0 0
    %487 = vmatpush2.bf16.msra.mxu0 0
    %488 = vmatprep.mubr.bf16.mxu0 0
    %489 = vmatmul.mubr.bf16.gmra.mxu0 %v104
    %v490 = vpop.f32.mrf.mxu0
    %v491 = vadd.f32 %v438, %v490
    %v492 = vpop.f32.mrf.mxu0
    %v493 = vadd.f32 %v440, %v492
    %v494 = vpop.f32.mrf.mxu0
    %v495 = vadd.f32 %v442, %v494
    %v496 = vpop.f32.mrf.mxu0
    %v497 = vadd.f32 %v444, %v496
    %498 = vmatprep.mubr.bf16.mxu0 0
    %499 = vmatmul.mubr.bf16.gmra.mxu0 %v105
    %v500 = vpop.f32.mrf.mxu0
    %v501 = vadd.f32 %v448, %v500
    %v502 = vpop.f32.mrf.mxu0
    %v503 = vadd.f32 %v450, %v502
    %v504 = vpop.f32.mrf.mxu0
    %v505 = vadd.f32 %v452, %v504
    %v506 = vpop.f32.mrf.mxu0
    %v507 = vadd.f32 %v454, %v506
    %508 = vdwg.mxu0
    %s509 = scalar_lea.vmem %s1, 256
    %v510 = vld [vmem:[%s509] sm:$0xff]
    %v511 = vld [vmem:[%s509 + $0x8] sm:$0xff]
    %v512 = vld [vmem:[%s509 + $0x10] sm:$0xff]
    %v513 = vld [vmem:[%s509 + $0x18] sm:$0xff]
    %v514 = vld [vmem:[%s509 + $0x20] sm:$0xff]
    %v515 = vld [vmem:[%s509 + $0x28] sm:$0xff]
    %v516 = vld [vmem:[%s509 + $0x30] sm:$0xff]
    %v517 = vld [vmem:[%s509 + $0x38] sm:$0xff]
    %v518 = vld [vmem:[%s509 + $0x40] sm:$0xff]
    %v519 = vld [vmem:[%s509 + $0x48] sm:$0xff]
    %v520 = vld [vmem:[%s509 + $0x50] sm:$0xff]
    %v521 = vld [vmem:[%s509 + $0x58] sm:$0xff]
    %v522 = vld [vmem:[%s509 + $0x60] sm:$0xff]
    %v523 = vld [vmem:[%s509 + $0x68] sm:$0xff]
    %v524 = vld [vmem:[%s509 + $0x70] sm:$0xff]
    %v525 = vld [vmem:[%s509 + $0x78] sm:$0xff]
    %v542 = vunpack.c.l.b16 %v510
    %v543 = vunpack.c.h.b16 %v510
    %v544 = vunpack.c.l.b16 %v511
    %v545 = vunpack.c.h.b16 %v511
    %v546 = vunpack.c.l.b16 %v512
    %v547 = vunpack.c.h.b16 %v512
    %v548 = vunpack.c.l.b16 %v513
    %v549 = vunpack.c.h.b16 %v513
    %v550 = vunpack.c.l.b16 %v514
    %v551 = vunpack.c.h.b16 %v514
    %v552 = vunpack.c.l.b16 %v515
    %v553 = vunpack.c.h.b16 %v515
    %v554 = vunpack.c.l.b16 %v516
    %v555 = vunpack.c.h.b16 %v516
    %v556 = vunpack.c.l.b16 %v517
    %v557 = vunpack.c.h.b16 %v517
    %v558 = vunpack.c.l.b16 %v518
    %v559 = vunpack.c.h.b16 %v518
    %v560 = vunpack.c.l.b16 %v519
    %v561 = vunpack.c.h.b16 %v519
    %v562 = vunpack.c.l.b16 %v520
    %v563 = vunpack.c.h.b16 %v520
    %v564 = vunpack.c.l.b16 %v521
    %v565 = vunpack.c.h.b16 %v521
    %v566 = vunpack.c.l.b16 %v522
    %v567 = vunpack.c.h.b16 %v522
    %v568 = vunpack.c.l.b16 %v523
    %v569 = vunpack.c.h.b16 %v523
    %v570 = vunpack.c.l.b16 %v524
    %v571 = vunpack.c.h.b16 %v524
    %v572 = vunpack.c.l.b16 %v525
    %v573 = vunpack.c.h.b16 %v525
    %v574 = vpack.c.b16 %v544, %v542
    %v575 = vpack.c.b16 %v545, %v543
    %v576 = vpack.c.b16 %v548, %v546
    %v577 = vpack.c.b16 %v549, %v547
    %v578 = vpack.c.b16 %v552, %v550
    %v579 = vpack.c.b16 %v553, %v551
    %v580 = vpack.c.b16 %v556, %v554
    %v581 = vpack.c.b16 %v557, %v555
    %v582 = vpack.c.b16 %v560, %v558
    %v583 = vpack.c.b16 %v561, %v559
    %v584 = vpack.c.b16 %v564, %v562
    %v585 = vpack.c.b16 %v565, %v563
    %v586 = vpack.c.b16 %v568, %v566
    %v587 = vpack.c.b16 %v569, %v567
    %v588 = vpack.c.b16 %v572, %v570
    %v589 = vpack.c.b16 %v573, %v571
    %606 = vmatprep.subr.bf16.mxu0 %v589
    %607 = vmatpush1.bf16.msra.mxu0 %v588
    %608 = vmatprep.subr.bf16.mxu0 %v587
    %609 = vmatpush1.bf16.msra.mxu0 %v586
    %610 = vmatprep.subr.bf16.mxu0 %v585
    %611 = vmatpush1.bf16.msra.mxu0 %v584
    %612 = vmatprep.subr.bf16.mxu0 %v583
    %613 = vmatpush1.bf16.msra.mxu0 %v582
    %614 = vmatprep.subr.bf16.mxu0 %v581
    %615 = vmatpush1.bf16.msra.mxu0 %v580
    %616 = vmatprep.subr.bf16.mxu0 %v579
    %617 = vmatpush1.bf16.msra.mxu0 %v578
    %618 = vmatprep.subr.bf16.mxu0 %v577
    %619 = vmatpush1.bf16.msra.mxu0 %v576
    %620 = vmatprep.subr.bf16.mxu0 %v575
    %621 = vmatpush1.bf16.msra.mxu0 %v574
    %622 = vmatprep.subr.bf16.mxu0 0
    %623 = vmatpush2.bf16.msra.mxu0 0
    %624 = vmatprep.subr.bf16.mxu0 0
    %625 = vmatpush2.bf16.msra.mxu0 0
    %626 = vmatprep.subr.bf16.mxu0 0
    %627 = vmatpush2.bf16.msra.mxu0 0
    %628 = vmatprep.subr.bf16.mxu0 0
    %629 = vmatpush2.bf16.msra.mxu0 0
    %630 = vmatprep.subr.bf16.mxu0 0
    %631 = vmatpush2.bf16.msra.mxu0 0
    %632 = vmatprep.subr.bf16.mxu0 0
    %633 = vmatpush2.bf16.msra.mxu0 0
    %634 = vmatprep.subr.bf16.mxu0 0
    %635 = vmatpush2.bf16.msra.mxu0 0
    %636 = vmatprep.subr.bf16.mxu0 0
    %637 = vmatpush2.bf16.msra.mxu0 0
    %638 = vmatprep.mubr.bf16.mxu0 0
    %639 = vmatmul.mubr.bf16.gmra.mxu0 %v399
    %v640 = vpop.f32.mrf.mxu0
    %v641 = vadd.f32 0.0, %v640
    %v642 = vpop.f32.mrf.mxu0
    %v643 = vadd.f32 0.0, %v642
    %v644 = vpop.f32.mrf.mxu0
    %v645 = vadd.f32 0.0, %v644
    %v646 = vpop.f32.mrf.mxu0
    %v647 = vadd.f32 0.0, %v646
    %648 = vmatprep.mubr.bf16.mxu0 0
    %649 = vmatmul.mubr.bf16.gmra.mxu0 %v400
    %v650 = vpop.f32.mrf.mxu0
    %v651 = vadd.f32 0.0, %v650
    %v652 = vpop.f32.mrf.mxu0
    %v653 = vadd.f32 0.0, %v652
    %v654 = vpop.f32.mrf.mxu0
    %v655 = vadd.f32 0.0, %v654
    %v656 = vpop.f32.mrf.mxu0
    %v657 = vadd.f32 0.0, %v656
    %658 = vdwg.mxu0
    %v659 = vadd.f32 %v368, %v641
    %v660 = vadd.f32 %v370, %v643
    %v661 = vadd.f32 %v372, %v645
    %v662 = vadd.f32 %v374, %v647
    %v663 = vadd.f32 %v378, %v651
    %v664 = vadd.f32 %v380, %v653
    %v665 = vadd.f32 %v382, %v655
    %v666 = vadd.f32 %v384, %v657
    %s667 = scalar_lea.vmem %s0, 48
    %v668 = vld [vmem:[%s667] sm:$0xf]
    %v669 = vld [vmem:[%s667 + $0x4] sm:$0xf]
    %v670 = vld [vmem:[%s667 + $0x8] sm:$0xf]
    %v671 = vld [vmem:[%s667 + $0xc] sm:$0xf]
    %v676 = vunpack.c.l.b16 %v668
    %v677 = vunpack.c.l.b16 %v669
    %v678 = vunpack.c.l.b16 %v670
    %v679 = vunpack.c.l.b16 %v671
    %v680 = vpack.c.b16 %v677, %v676
    %v681 = vpack.c.b16 %v679, %v678
    %684 = vmatprep.subr.bf16.mxu0 %v589
    %685 = vmatpush1.bf16.msra.mxu0 %v588
    %686 = vmatprep.subr.bf16.mxu0 %v587
    %687 = vmatpush1.bf16.msra.mxu0 %v586
    %688 = vmatprep.subr.bf16.mxu0 %v585
    %689 = vmatpush1.bf16.msra.mxu0 %v584
    %690 = vmatprep.subr.bf16.mxu0 %v583
    %691 = vmatpush1.bf16.msra.mxu0 %v582
    %692 = vmatprep.subr.bf16.mxu0 %v581
    %693 = vmatpush1.bf16.msra.mxu0 %v580
    %694 = vmatprep.subr.bf16.mxu0 %v579
    %695 = vmatpush1.bf16.msra.mxu0 %v578
    %696 = vmatprep.subr.bf16.mxu0 %v577
    %697 = vmatpush1.bf16.msra.mxu0 %v576
    %698 = vmatprep.subr.bf16.mxu0 %v575
    %699 = vmatpush1.bf16.msra.mxu0 %v574
    %700 = vmatprep.subr.bf16.mxu0 0
    %701 = vmatpush2.bf16.msra.mxu0 0
    %702 = vmatprep.subr.bf16.mxu0 0
    %703 = vmatpush2.bf16.msra.mxu0 0
    %704 = vmatprep.subr.bf16.mxu0 0
    %705 = vmatpush2.bf16.msra.mxu0 0
    %706 = vmatprep.subr.bf16.mxu0 0
    %707 = vmatpush2.bf16.msra.mxu0 0
    %708 = vmatprep.subr.bf16.mxu0 0
    %709 = vmatpush2.bf16.msra.mxu0 0
    %710 = vmatprep.subr.bf16.mxu0 0
    %711 = vmatpush2.bf16.msra.mxu0 0
    %712 = vmatprep.subr.bf16.mxu0 0
    %713 = vmatpush2.bf16.msra.mxu0 0
    %714 = vmatprep.subr.bf16.mxu0 0
    %715 = vmatpush2.bf16.msra.mxu0 0
    %716 = vmatprep.mubr.bf16.mxu0 0
    %717 = vmatmul.mubr.bf16.gmra.mxu0 %v680
    %v718 = vpop.f32.mrf.mxu0
    %v719 = vadd.f32 0.0, %v718
    %v720 = vpop.f32.mrf.mxu0
    %v721 = vadd.f32 0.0, %v720
    %v722 = vpop.f32.mrf.mxu0
    %v723 = vadd.f32 0.0, %v722
    %v724 = vpop.f32.mrf.mxu0
    %v725 = vadd.f32 0.0, %v724
    %726 = vmatprep.mubr.bf16.mxu0 0
    %727 = vmatmul.mubr.bf16.gmra.mxu0 %v681
    %v728 = vpop.f32.mrf.mxu0
    %v729 = vadd.f32 0.0, %v728
    %v730 = vpop.f32.mrf.mxu0
    %v731 = vadd.f32 0.0, %v730
    %v732 = vpop.f32.mrf.mxu0
    %v733 = vadd.f32 0.0, %v732
    %v734 = vpop.f32.mrf.mxu0
    %v735 = vadd.f32 0.0, %v734
    %736 = vdwg.mxu0
    %v737 = vadd.f32 %v491, %v719
    %v738 = vadd.f32 %v493, %v721
    %v739 = vadd.f32 %v495, %v723
    %v740 = vadd.f32 %v497, %v725
    %v741 = vadd.f32 %v501, %v729
    %v742 = vadd.f32 %v503, %v731
    %v743 = vadd.f32 %v505, %v733
    %v744 = vadd.f32 %v507, %v735
    %s745 = scalar_lea.vmem %s1, 384
    %v746 = vld [vmem:[%s745] sm:$0xff]
    %v747 = vld [vmem:[%s745 + $0x8] sm:$0xff]
    %v748 = vld [vmem:[%s745 + $0x10] sm:$0xff]
    %v749 = vld [vmem:[%s745 + $0x18] sm:$0xff]
    %v750 = vld [vmem:[%s745 + $0x20] sm:$0xff]
    %v751 = vld [vmem:[%s745 + $0x28] sm:$0xff]
    %v752 = vld [vmem:[%s745 + $0x30] sm:$0xff]
    %v753 = vld [vmem:[%s745 + $0x38] sm:$0xff]
    %v754 = vld [vmem:[%s745 + $0x40] sm:$0xff]
    %v755 = vld [vmem:[%s745 + $0x48] sm:$0xff]
    %v756 = vld [vmem:[%s745 + $0x50] sm:$0xff]
    %v757 = vld [vmem:[%s745 + $0x58] sm:$0xff]
    %v758 = vld [vmem:[%s745 + $0x60] sm:$0xff]
    %v759 = vld [vmem:[%s745 + $0x68] sm:$0xff]
    %v760 = vld [vmem:[%s745 + $0x70] sm:$0xff]
    %v761 = vld [vmem:[%s745 + $0x78] sm:$0xff]
    %v778 = vunpack.c.l.b16 %v746
    %v779 = vunpack.c.h.b16 %v746
    %v780 = vunpack.c.l.b16 %v747
    %v781 = vunpack.c.h.b16 %v747
    %v782 = vunpack.c.l.b16 %v748
    %v783 = vunpack.c.h.b16 %v748
    %v784 = vunpack.c.l.b16 %v749
    %v785 = vunpack.c.h.b16 %v749
    %v786 = vunpack.c.l.b16 %v750
    %v787 = vunpack.c.h.b16 %v750
    %v788 = vunpack.c.l.b16 %v751
    %v789 = vunpack.c.h.b16 %v751
    %v790 = vunpack.c.l.b16 %v752
    %v791 = vunpack.c.h.b16 %v752
    %v792 = vunpack.c.l.b16 %v753
    %v793 = vunpack.c.h.b16 %v753
    %v794 = vunpack.c.l.b16 %v754
    %v795 = vunpack.c.h.b16 %v754
    %v796 = vunpack.c.l.b16 %v755
    %v797 = vunpack.c.h.b16 %v755
    %v798 = vunpack.c.l.b16 %v756
    %v799 = vunpack.c.h.b16 %v756
    %v800 = vunpack.c.l.b16 %v757
    %v801 = vunpack.c.h.b16 %v757
    %v802 = vunpack.c.l.b16 %v758
    %v803 = vunpack.c.h.b16 %v758
    %v804 = vunpack.c.l.b16 %v759
    %v805 = vunpack.c.h.b16 %v759
    %v806 = vunpack.c.l.b16 %v760
    %v807 = vunpack.c.h.b16 %v760
    %v808 = vunpack.c.l.b16 %v761
    %v809 = vunpack.c.h.b16 %v761
    %v810 = vpack.c.b16 %v780, %v778
    %v811 = vpack.c.b16 %v781, %v779
    %v812 = vpack.c.b16 %v784, %v782
    %v813 = vpack.c.b16 %v785, %v783
    %v814 = vpack.c.b16 %v788, %v786
    %v815 = vpack.c.b16 %v789, %v787
    %v816 = vpack.c.b16 %v792, %v790
    %v817 = vpack.c.b16 %v793, %v791
    %v818 = vpack.c.b16 %v796, %v794
    %v819 = vpack.c.b16 %v797, %v795
    %v820 = vpack.c.b16 %v800, %v798
    %v821 = vpack.c.b16 %v801, %v799
    %v822 = vpack.c.b16 %v804, %v802
    %v823 = vpack.c.b16 %v805, %v803
    %v824 = vpack.c.b16 %v808, %v806
    %v825 = vpack.c.b16 %v809, %v807
    %842 = vmatprep.subr.bf16.mxu0 %v825
    %843 = vmatpush1.bf16.msra.mxu0 %v824
    %844 = vmatprep.subr.bf16.mxu0 %v823
    %845 = vmatpush1.bf16.msra.mxu0 %v822
    %846 = vmatprep.subr.bf16.mxu0 %v821
    %847 = vmatpush1.bf16.msra.mxu0 %v820
    %848 = vmatprep.subr.bf16.mxu0 %v819
    %849 = vmatpush1.bf16.msra.mxu0 %v818
    %850 = vmatprep.subr.bf16.mxu0 %v817
    %851 = vmatpush1.bf16.msra.mxu0 %v816
    %852 = vmatprep.subr.bf16.mxu0 %v815
    %853 = vmatpush1.bf16.msra.mxu0 %v814
    %854 = vmatprep.subr.bf16.mxu0 %v813
    %855 = vmatpush1.bf16.msra.mxu0 %v812
    %856 = vmatprep.subr.bf16.mxu0 %v811
    %857 = vmatpush1.bf16.msra.mxu0 %v810
    %858 = vmatprep.subr.bf16.mxu0 0
    %859 = vmatpush2.bf16.msra.mxu0 0
    %860 = vmatprep.subr.bf16.mxu0 0
    %861 = vmatpush2.bf16.msra.mxu0 0
    %862 = vmatprep.subr.bf16.mxu0 0
    %863 = vmatpush2.bf16.msra.mxu0 0
    %864 = vmatprep.subr.bf16.mxu0 0
    %865 = vmatpush2.bf16.msra.mxu0 0
    %866 = vmatprep.subr.bf16.mxu0 0
    %867 = vmatpush2.bf16.msra.mxu0 0
    %868 = vmatprep.subr.bf16.mxu0 0
    %869 = vmatpush2.bf16.msra.mxu0 0
    %870 = vmatprep.subr.bf16.mxu0 0
    %871 = vmatpush2.bf16.msra.mxu0 0
    %872 = vmatprep.subr.bf16.mxu0 0
    %873 = vmatpush2.bf16.msra.mxu0 0
    %874 = vmatprep.mubr.bf16.mxu0 0
    %875 = vmatmul.mubr.bf16.gmra.mxu0 %v680
    %v876 = vpop.f32.mrf.mxu0
    %v877 = vadd.f32 0.0, %v876
    %v878 = vpop.f32.mrf.mxu0
    %v879 = vadd.f32 0.0, %v878
    %v880 = vpop.f32.mrf.mxu0
    %v881 = vadd.f32 0.0, %v880
    %v882 = vpop.f32.mrf.mxu0
    %v883 = vadd.f32 0.0, %v882
    %884 = vmatprep.mubr.bf16.mxu0 0
    %885 = vmatmul.mubr.bf16.gmra.mxu0 %v681
    %v886 = vpop.f32.mrf.mxu0
    %v887 = vadd.f32 0.0, %v886
    %v888 = vpop.f32.mrf.mxu0
    %v889 = vadd.f32 0.0, %v888
    %v890 = vpop.f32.mrf.mxu0
    %v891 = vadd.f32 0.0, %v890
    %v892 = vpop.f32.mrf.mxu0
    %v893 = vadd.f32 0.0, %v892
    %894 = vdwg.mxu0
    %v895 = vadd.f32 %v659, %v877
    %v896 = vadd.f32 %v660, %v879
    %v897 = vadd.f32 %v661, %v881
    %v898 = vadd.f32 %v662, %v883
    %v899 = vadd.f32 %v663, %v887
    %v900 = vadd.f32 %v664, %v889
    %v901 = vadd.f32 %v665, %v891
    %v902 = vadd.f32 %v666, %v893
    %s903 = scalar_lea.vmem %s0, 64
    %v904 = vld [vmem:[%s903] sm:$0xf]
    %v905 = vld [vmem:[%s903 + $0x4] sm:$0xf]
    %v906 = vld [vmem:[%s903 + $0x8] sm:$0xf]
    %v907 = vld [vmem:[%s903 + $0xc] sm:$0xf]
    %v912 = vunpack.c.l.b16 %v904
    %v913 = vunpack.c.l.b16 %v905
    %v914 = vunpack.c.l.b16 %v906
    %v915 = vunpack.c.l.b16 %v907
    %v916 = vpack.c.b16 %v913, %v912
    %v917 = vpack.c.b16 %v915, %v914
    %920 = vmatprep.subr.bf16.mxu0 %v825
    %921 = vmatpush1.bf16.msra.mxu0 %v824
    %922 = vmatprep.subr.bf16.mxu0 %v823
    %923 = vmatpush1.bf16.msra.mxu0 %v822
    %924 = vmatprep.subr.bf16.mxu0 %v821
    %925 = vmatpush1.bf16.msra.mxu0 %v820
    %926 = vmatprep.subr.bf16.mxu0 %v819
    %927 = vmatpush1.bf16.msra.mxu0 %v818
    %928 = vmatprep.subr.bf16.mxu0 %v817
    %929 = vmatpush1.bf16.msra.mxu0 %v816
    %930 = vmatprep.subr.bf16.mxu0 %v815
    %931 = vmatpush1.bf16.msra.mxu0 %v814
    %932 = vmatprep.subr.bf16.mxu0 %v813
    %933 = vmatpush1.bf16.msra.mxu0 %v812
    %934 = vmatprep.subr.bf16.mxu0 %v811
    %935 = vmatpush1.bf16.msra.mxu0 %v810
    %936 = vmatprep.subr.bf16.mxu0 0
    %937 = vmatpush2.bf16.msra.mxu0 0
    %938 = vmatprep.subr.bf16.mxu0 0
    %939 = vmatpush2.bf16.msra.mxu0 0
    %940 = vmatprep.subr.bf16.mxu0 0
    %941 = vmatpush2.bf16.msra.mxu0 0
    %942 = vmatprep.subr.bf16.mxu0 0
    %943 = vmatpush2.bf16.msra.mxu0 0
    %944 = vmatprep.subr.bf16.mxu0 0
    %945 = vmatpush2.bf16.msra.mxu0 0
    %946 = vmatprep.subr.bf16.mxu0 0
    %947 = vmatpush2.bf16.msra.mxu0 0
    %948 = vmatprep.subr.bf16.mxu0 0
    %949 = vmatpush2.bf16.msra.mxu0 0
    %950 = vmatprep.subr.bf16.mxu0 0
    %951 = vmatpush2.bf16.msra.mxu0 0
    %952 = vmatprep.mubr.bf16.mxu0 0
    %953 = vmatmul.mubr.bf16.gmra.mxu0 %v916
    %v954 = vpop.f32.mrf.mxu0
    %v955 = vadd.f32 0.0, %v954
    %v956 = vpop.f32.mrf.mxu0
    %v957 = vadd.f32 0.0, %v956
    %v958 = vpop.f32.mrf.mxu0
    %v959 = vadd.f32 0.0, %v958
    %v960 = vpop.f32.mrf.mxu0
    %v961 = vadd.f32 0.0, %v960
    %962 = vmatprep.mubr.bf16.mxu0 0
    %963 = vmatmul.mubr.bf16.gmra.mxu0 %v917
    %v964 = vpop.f32.mrf.mxu0
    %v965 = vadd.f32 0.0, %v964
    %v966 = vpop.f32.mrf.mxu0
    %v967 = vadd.f32 0.0, %v966
    %v968 = vpop.f32.mrf.mxu0
    %v969 = vadd.f32 0.0, %v968
    %v970 = vpop.f32.mrf.mxu0
    %v971 = vadd.f32 0.0, %v970
    %972 = vdwg.mxu0
    %v973 = vadd.f32 %v737, %v955
    %v974 = vadd.f32 %v738, %v957
    %v975 = vadd.f32 %v739, %v959
    %v976 = vadd.f32 %v740, %v961
    %v977 = vadd.f32 %v741, %v965
    %v978 = vadd.f32 %v742, %v967
    %v979 = vadd.f32 %v743, %v969
    %v980 = vadd.f32 %v744, %v971
    %s981 = scalar_lea.vmem %s1, 512
    %v982 = vld [vmem:[%s981] sm:$0xff]
    %v983 = vld [vmem:[%s981 + $0x8] sm:$0xff]
    %v984 = vld [vmem:[%s981 + $0x10] sm:$0xff]
    %v985 = vld [vmem:[%s981 + $0x18] sm:$0xff]
    %v986 = vld [vmem:[%s981 + $0x20] sm:$0xff]
    %v987 = vld [vmem:[%s981 + $0x28] sm:$0xff]
    %v988 = vld [vmem:[%s981 + $0x30] sm:$0xff]
    %v989 = vld [vmem:[%s981 + $0x38] sm:$0xff]
    %v990 = vld [vmem:[%s981 + $0x40] sm:$0xff]
    %v991 = vld [vmem:[%s981 + $0x48] sm:$0xff]
    %v992 = vld [vmem:[%s981 + $0x50] sm:$0xff]
    %v993 = vld [vmem:[%s981 + $0x58] sm:$0xff]
    %v994 = vld [vmem:[%s981 + $0x60] sm:$0xff]
    %v995 = vld [vmem:[%s981 + $0x68] sm:$0xff]
    %v996 = vld [vmem:[%s981 + $0x70] sm:$0xff]
    %v997 = vld [vmem:[%s981 + $0x78] sm:$0xff]
    %v1014 = vunpack.c.l.b16 %v982
    %v1015 = vunpack.c.h.b16 %v982
    %v1016 = vunpack.c.l.b16 %v983
    %v1017 = vunpack.c.h.b16 %v983
    %v1018 = vunpack.c.l.b16 %v984
    %v1019 = vunpack.c.h.b16 %v984
    %v1020 = vunpack.c.l.b16 %v985
    %v1021 = vunpack.c.h.b16 %v985
    %v1022 = vunpack.c.l.b16 %v986
    %v1023 = vunpack.c.h.b16 %v986
    %v1024 = vunpack.c.l.b16 %v987
    %v1025 = vunpack.c.h.b16 %v987
    %v1026 = vunpack.c.l.b16 %v988
    %v1027 = vunpack.c.h.b16 %v988
    %v1028 = vunpack.c.l.b16 %v989
    %v1029 = vunpack.c.h.b16 %v989
    %v1030 = vunpack.c.l.b16 %v990
    %v1031 = vunpack.c.h.b16 %v990
    %v1032 = vunpack.c.l.b16 %v991
    %v1033 = vunpack.c.h.b16 %v991
    %v1034 = vunpack.c.l.b16 %v992
    %v1035 = vunpack.c.h.b16 %v992
    %v1036 = vunpack.c.l.b16 %v993
    %v1037 = vunpack.c.h.b16 %v993
    %v1038 = vunpack.c.l.b16 %v994
    %v1039 = vunpack.c.h.b16 %v994
    %v1040 = vunpack.c.l.b16 %v995
    %v1041 = vunpack.c.h.b16 %v995
    %v1042 = vunpack.c.l.b16 %v996
    %v1043 = vunpack.c.h.b16 %v996
    %v1044 = vunpack.c.l.b16 %v997
    %v1045 = vunpack.c.h.b16 %v997
    %v1046 = vpack.c.b16 %v1016, %v1014
    %v1047 = vpack.c.b16 %v1017, %v1015
    %v1048 = vpack.c.b16 %v1020, %v1018
    %v1049 = vpack.c.b16 %v1021, %v1019
    %v1050 = vpack.c.b16 %v1024, %v1022
    %v1051 = vpack.c.b16 %v1025, %v1023
    %v1052 = vpack.c.b16 %v1028, %v1026
    %v1053 = vpack.c.b16 %v1029, %v1027
    %v1054 = vpack.c.b16 %v1032, %v1030
    %v1055 = vpack.c.b16 %v1033, %v1031
    %v1056 = vpack.c.b16 %v1036, %v1034
    %v1057 = vpack.c.b16 %v1037, %v1035
    %v1058 = vpack.c.b16 %v1040, %v1038
    %v1059 = vpack.c.b16 %v1041, %v1039
    %v1060 = vpack.c.b16 %v1044, %v1042
    %v1061 = vpack.c.b16 %v1045, %v1043
    %1078 = vmatprep.subr.bf16.mxu0 %v1061
    %1079 = vmatpush1.bf16.msra.mxu0 %v1060
    %1080 = vmatprep.subr.bf16.mxu0 %v1059
    %1081 = vmatpush1.bf16.msra.mxu0 %v1058
    %1082 = vmatprep.subr.bf16.mxu0 %v1057
    %1083 = vmatpush1.bf16.msra.mxu0 %v1056
    %1084 = vmatprep.subr.bf16.mxu0 %v1055
    %1085 = vmatpush1.bf16.msra.mxu0 %v1054
    %1086 = vmatprep.subr.bf16.mxu0 %v1053
    %1087 = vmatpush1.bf16.msra.mxu0 %v1052
    %1088 = vmatprep.subr.bf16.mxu0 %v1051
    %1089 = vmatpush1.bf16.msra.mxu0 %v1050
    %1090 = vmatprep.subr.bf16.mxu0 %v1049
    %1091 = vmatpush1.bf16.msra.mxu0 %v1048
    %1092 = vmatprep.subr.bf16.mxu0 %v1047
    %1093 = vmatpush1.bf16.msra.mxu0 %v1046
    %1094 = vmatprep.subr.bf16.mxu0 0
    %1095 = vmatpush2.bf16.msra.mxu0 0
    %1096 = vmatprep.subr.bf16.mxu0 0
    %1097 = vmatpush2.bf16.msra.mxu0 0
    %1098 = vmatprep.subr.bf16.mxu0 0
    %1099 = vmatpush2.bf16.msra.mxu0 0
    %1100 = vmatprep.subr.bf16.mxu0 0
    %1101 = vmatpush2.bf16.msra.mxu0 0
    %1102 = vmatprep.subr.bf16.mxu0 0
    %1103 = vmatpush2.bf16.msra.mxu0 0
    %1104 = vmatprep.subr.bf16.mxu0 0
    %1105 = vmatpush2.bf16.msra.mxu0 0
    %1106 = vmatprep.subr.bf16.mxu0 0
    %1107 = vmatpush2.bf16.msra.mxu0 0
    %1108 = vmatprep.subr.bf16.mxu0 0
    %1109 = vmatpush2.bf16.msra.mxu0 0
    %1110 = vmatprep.mubr.bf16.mxu0 0
    %1111 = vmatmul.mubr.bf16.gmra.mxu0 %v916
    %v1112 = vpop.f32.mrf.mxu0
    %v1113 = vadd.f32 0.0, %v1112
    %v1114 = vpop.f32.mrf.mxu0
    %v1115 = vadd.f32 0.0, %v1114
    %v1116 = vpop.f32.mrf.mxu0
    %v1117 = vadd.f32 0.0, %v1116
    %v1118 = vpop.f32.mrf.mxu0
    %v1119 = vadd.f32 0.0, %v1118
    %1120 = vmatprep.mubr.bf16.mxu0 0
    %1121 = vmatmul.mubr.bf16.gmra.mxu0 %v917
    %v1122 = vpop.f32.mrf.mxu0
    %v1123 = vadd.f32 0.0, %v1122
    %v1124 = vpop.f32.mrf.mxu0
    %v1125 = vadd.f32 0.0, %v1124
    %v1126 = vpop.f32.mrf.mxu0
    %v1127 = vadd.f32 0.0, %v1126
    %v1128 = vpop.f32.mrf.mxu0
    %v1129 = vadd.f32 0.0, %v1128
    %1130 = vdwg.mxu0
    %v1131 = vadd.f32 %v895, %v1113
    %v1132 = vadd.f32 %v896, %v1115
    %v1133 = vadd.f32 %v897, %v1117
    %v1134 = vadd.f32 %v898, %v1119
    %v1135 = vadd.f32 %v899, %v1123
    %v1136 = vadd.f32 %v900, %v1125
    %v1137 = vadd.f32 %v901, %v1127
    %v1138 = vadd.f32 %v902, %v1129
    %s1139 = scalar_lea.vmem %s0, 80
    %v1140 = vld [vmem:[%s1139] sm:$0xf]
    %v1141 = vld [vmem:[%s1139 + $0x4] sm:$0xf]
    %v1142 = vld [vmem:[%s1139 + $0x8] sm:$0xf]
    %v1143 = vld [vmem:[%s1139 + $0xc] sm:$0xf]
    %v1148 = vunpack.c.l.b16 %v1140
    %v1149 = vunpack.c.l.b16 %v1141
    %v1150 = vunpack.c.l.b16 %v1142
    %v1151 = vunpack.c.l.b16 %v1143
    %v1152 = vpack.c.b16 %v1149, %v1148
    %v1153 = vpack.c.b16 %v1151, %v1150
    %1156 = vmatprep.subr.bf16.mxu0 %v1061
    %1157 = vmatpush1.bf16.msra.mxu0 %v1060
    %1158 = vmatprep.subr.bf16.mxu0 %v1059
    %1159 = vmatpush1.bf16.msra.mxu0 %v1058
    %1160 = vmatprep.subr.bf16.mxu0 %v1057
    %1161 = vmatpush1.bf16.msra.mxu0 %v1056
    %1162 = vmatprep.subr.bf16.mxu0 %v1055
    %1163 = vmatpush1.bf16.msra.mxu0 %v1054
    %1164 = vmatprep.subr.bf16.mxu0 %v1053
    %1165 = vmatpush1.bf16.msra.mxu0 %v1052
    %1166 = vmatprep.subr.bf16.mxu0 %v1051
    %1167 = vmatpush1.bf16.msra.mxu0 %v1050
    %1168 = vmatprep.subr.bf16.mxu0 %v1049
    %1169 = vmatpush1.bf16.msra.mxu0 %v1048
    %1170 = vmatprep.subr.bf16.mxu0 %v1047
    %1171 = vmatpush1.bf16.msra.mxu0 %v1046
    %1172 = vmatprep.subr.bf16.mxu0 0
    %1173 = vmatpush2.bf16.msra.mxu0 0
    %1174 = vmatprep.subr.bf16.mxu0 0
    %1175 = vmatpush2.bf16.msra.mxu0 0
    %1176 = vmatprep.subr.bf16.mxu0 0
    %1177 = vmatpush2.bf16.msra.mxu0 0
    %1178 = vmatprep.subr.bf16.mxu0 0
    %1179 = vmatpush2.bf16.msra.mxu0 0
    %1180 = vmatprep.subr.bf16.mxu0 0
    %1181 = vmatpush2.bf16.msra.mxu0 0
    %1182 = vmatprep.subr.bf16.mxu0 0
    %1183 = vmatpush2.bf16.msra.mxu0 0
    %1184 = vmatprep.subr.bf16.mxu0 0
    %1185 = vmatpush2.bf16.msra.mxu0 0
    %1186 = vmatprep.subr.bf16.mxu0 0
    %1187 = vmatpush2.bf16.msra.mxu0 0
    %1188 = vmatprep.mubr.bf16.mxu0 0
    %1189 = vmatmul.mubr.bf16.gmra.mxu0 %v1152
    %v1190 = vpop.f32.mrf.mxu0
    %v1191 = vadd.f32 0.0, %v1190
    %v1192 = vpop.f32.mrf.mxu0
    %v1193 = vadd.f32 0.0, %v1192
    %v1194 = vpop.f32.mrf.mxu0
    %v1195 = vadd.f32 0.0, %v1194
    %v1196 = vpop.f32.mrf.mxu0
    %v1197 = vadd.f32 0.0, %v1196
    %1198 = vmatprep.mubr.bf16.mxu0 0
    %1199 = vmatmul.mubr.bf16.gmra.mxu0 %v1153
    %v1200 = vpop.f32.mrf.mxu0
    %v1201 = vadd.f32 0.0, %v1200
    %v1202 = vpop.f32.mrf.mxu0
    %v1203 = vadd.f32 0.0, %v1202
    %v1204 = vpop.f32.mrf.mxu0
    %v1205 = vadd.f32 0.0, %v1204
    %v1206 = vpop.f32.mrf.mxu0
    %v1207 = vadd.f32 0.0, %v1206
    %1208 = vdwg.mxu0
    %v1209 = vadd.f32 %v973, %v1191
    %v1210 = vadd.f32 %v974, %v1193
    %v1211 = vadd.f32 %v975, %v1195
    %v1212 = vadd.f32 %v976, %v1197
    %v1213 = vadd.f32 %v977, %v1201
    %v1214 = vadd.f32 %v978, %v1203
    %v1215 = vadd.f32 %v979, %v1205
    %v1216 = vadd.f32 %v980, %v1207
    %v1217 = vld [vmem:[%s2] sm:$0x3]
    %v1219 = vlaneseq
    %v1220 = vshrl.u32 %v1219, 7
    %v1221 = vsub.s32 0, %v1220
    %v1222 = vrot.slane %v1217, %v1221
    %v1223 = vlaneseq
    %v1224 = vshrl.u32 %v1223, 7
    %v1225 = vsub.s32 1, %v1224
    %v1226 = vrot.slane %v1217, %v1225
    %v1229 = vadd.f32 %v1131, %v1222
    %v1230 = vadd.f32 %v1132, %v1226
    %v1231 = vadd.f32 %v1133, %v1222
    %v1232 = vadd.f32 %v1134, %v1226
    %v1233 = vadd.f32 %v1135, %v1222
    %v1234 = vadd.f32 %v1136, %v1226
    %v1235 = vadd.f32 %v1137, %v1222
    %v1236 = vadd.f32 %v1138, %v1226
    %v1237 = vmax.f32 %v1229, 0.0
    %v1238 = vmax.f32 %v1230, 0.0
    %v1239 = vmax.f32 %v1231, 0.0
    %v1240 = vmax.f32 %v1232, 0.0
    %v1241 = vmax.f32 %v1233, 0.0
    %v1242 = vmax.f32 %v1234, 0.0
    %v1243 = vmax.f32 %v1235, 0.0
    %v1244 = vmax.f32 %v1236, 0.0
    %v1245 = vadd.f32 %v1209, %v1222
    %v1246 = vadd.f32 %v1210, %v1226
    %v1247 = vadd.f32 %v1211, %v1222
    %v1248 = vadd.f32 %v1212, %v1226
    %v1249 = vadd.f32 %v1213, %v1222
    %v1250 = vadd.f32 %v1214, %v1226
    %v1251 = vadd.f32 %v1215, %v1222
    %v1252 = vadd.f32 %v1216, %v1226
    %v1253 = vmax.f32 %v1245, 0.0
    %v1254 = vmax.f32 %v1246, 0.0
    %v1255 = vmax.f32 %v1247, 0.0
    %v1256 = vmax.f32 %v1248, 0.0
    %v1257 = vmax.f32 %v1249, 0.0
    %v1258 = vmax.f32 %v1250, 0.0
    %v1259 = vmax.f32 %v1251, 0.0
    %v1260 = vmax.f32 %v1252, 0.0
    %v1261 = vmax.f32 %v1237, %v1253
    %v1262 = vmax.f32 %v1238, %v1254
    %v1263 = vmax.f32 %v1239, %v1255
    %v1264 = vmax.f32 %v1240, %v1256
    %v1265 = vmax.f32 %v1241, %v1257
    %v1266 = vmax.f32 %v1242, %v1258
    %v1267 = vmax.f32 %v1243, %v1259
    %v1268 = vmax.f32 %v1244, %v1260
    %v1269 = vmax.f32 %v1261, %v1262
    %v1270 = vmax.f32 %v1263, %v1264
    %v1271 = vmax.f32 %v1265, %v1266
    %v1272 = vmax.f32 %v1267, %v1268
    %v1273 = vpack.c.bf16 %v1270, %v1269
    %v1274 = vpack.c.bf16 %v1271, %v1271
    %v1275 = vpack.c.bf16 %v1272, %v1271
    %v1276 = vpack.c.bf16 0.0, 0.0
    %v1277 = vld [vmem:[%s3] sm:$0xff]
    %v1278 = vld [vmem:[%s3 + $0x8] sm:$0xff]
    %v1279 = vld [vmem:[%s3 + $0x10] sm:$0xff]
    %v1280 = vld [vmem:[%s3 + $0x18] sm:$0xff]
    %v1281 = vld [vmem:[%s3 + $0x20] sm:$0xff]
    %v1282 = vld [vmem:[%s3 + $0x28] sm:$0xff]
    %v1283 = vld [vmem:[%s3 + $0x30] sm:$0xff]
    %v1284 = vld [vmem:[%s3 + $0x38] sm:$0xff]
    %v1285 = vld [vmem:[%s3 + $0x40] sm:$0xff]
    %v1286 = vld [vmem:[%s3 + $0x48] sm:$0xff]
    %v1287 = vld [vmem:[%s3 + $0x50] sm:$0xff]
    %v1288 = vld [vmem:[%s3 + $0x58] sm:$0xff]
    %v1289 = vld [vmem:[%s3 + $0x60] sm:$0xff]
    %v1290 = vld [vmem:[%s3 + $0x68] sm:$0xff]
    %v1291 = vld [vmem:[%s3 + $0x70] sm:$0xff]
    %v1292 = vld [vmem:[%s3 + $0x78] sm:$0xff]
    %s1293 = scalar_lea.vmem %s3, 128
    %v1294 = vld [vmem:[%s1293] sm:$0xff]
    %v1295 = vld [vmem:[%s1293 + $0x8] sm:$0xff]
    %v1296 = vld [vmem:[%s1293 + $0x10] sm:$0xff]
    %v1297 = vld [vmem:[%s1293 + $0x18] sm:$0xff]
    %v1298 = vld [vmem:[%s1293 + $0x20] sm:$0xff]
    %v1299 = vld [vmem:[%s1293 + $0x28] sm:$0xff]
    %v1300 = vld [vmem:[%s1293 + $0x30] sm:$0xff]
    %v1301 = vld [vmem:[%s1293 + $0x38] sm:$0xff]
    %v1302 = vld [vmem:[%s1293 + $0x40] sm:$0xff]
    %v1303 = vld [vmem:[%s1293 + $0x48] sm:$0xff]
    %v1304 = vld [vmem:[%s1293 + $0x50] sm:$0xff]
    %v1305 = vld [vmem:[%s1293 + $0x58] sm:$0xff]
    %v1306 = vld [vmem:[%s1293 + $0x60] sm:$0xff]
    %v1307 = vld [vmem:[%s1293 + $0x68] sm:$0xff]
    %v1308 = vld [vmem:[%s1293 + $0x70] sm:$0xff]
    %v1309 = vld [vmem:[%s1293 + $0x78] sm:$0xff]
    %v1326 = vunpack.c.l.b16 %v1294
    %v1327 = vunpack.c.h.b16 %v1294
    %v1328 = vunpack.c.l.b16 %v1295
    %v1329 = vunpack.c.h.b16 %v1295
    %v1330 = vunpack.c.l.b16 %v1296
    %v1331 = vunpack.c.h.b16 %v1296
    %v1332 = vunpack.c.l.b16 %v1297
    %v1333 = vunpack.c.h.b16 %v1297
    %v1334 = vunpack.c.l.b16 %v1298
    %v1335 = vunpack.c.h.b16 %v1298
    %v1336 = vunpack.c.l.b16 %v1299
    %v1337 = vunpack.c.h.b16 %v1299
    %v1338 = vunpack.c.l.b16 %v1300
    %v1339 = vunpack.c.h.b16 %v1300
    %v1340 = vunpack.c.l.b16 %v1301
    %v1341 = vunpack.c.h.b16 %v1301
    %v1342 = vunpack.c.l.b16 %v1302
    %v1343 = vunpack.c.h.b16 %v1302
    %v1344 = vunpack.c.l.b16 %v1303
    %v1345 = vunpack.c.h.b16 %v1303
    %v1346 = vunpack.c.l.b16 %v1304
    %v1347 = vunpack.c.h.b16 %v1304
    %v1348 = vunpack.c.l.b16 %v1305
    %v1349 = vunpack.c.h.b16 %v1305
    %v1350 = vunpack.c.l.b16 %v1306
    %v1351 = vunpack.c.h.b16 %v1306
    %v1352 = vunpack.c.l.b16 %v1307
    %v1353 = vunpack.c.h.b16 %v1307
    %v1354 = vunpack.c.l.b16 %v1308
    %v1355 = vunpack.c.h.b16 %v1308
    %v1356 = vunpack.c.l.b16 %v1309
    %v1357 = vunpack.c.h.b16 %v1309
    %v1358 = vpack.c.b16 %v1328, %v1326
    %v1359 = vpack.c.b16 %v1329, %v1327
    %v1360 = vpack.c.b16 %v1332, %v1330
    %v1361 = vpack.c.b16 %v1333, %v1331
    %v1362 = vpack.c.b16 %v1336, %v1334
    %v1363 = vpack.c.b16 %v1337, %v1335
    %v1364 = vpack.c.b16 %v1340, %v1338
    %v1365 = vpack.c.b16 %v1341, %v1339
    %v1366 = vpack.c.b16 %v1344, %v1342
    %v1367 = vpack.c.b16 %v1345, %v1343
    %v1368 = vpack.c.b16 %v1348, %v1346
    %v1369 = vpack.c.b16 %v1349, %v1347
    %v1370 = vpack.c.b16 %v1352, %v1350
    %v1371 = vpack.c.b16 %v1353, %v1351
    %v1372 = vpack.c.b16 %v1356, %v1354
    %v1373 = vpack.c.b16 %v1357, %v1355
    %1390 = vmatprep.subr.bf16.mxu0 %v1373
    %1391 = vmatpush1.bf16.msra.mxu0 %v1372
    %1392 = vmatprep.subr.bf16.mxu0 %v1371
    %1393 = vmatpush1.bf16.msra.mxu0 %v1370
    %1394 = vmatprep.subr.bf16.mxu0 %v1369
    %1395 = vmatpush1.bf16.msra.mxu0 %v1368
    %1396 = vmatprep.subr.bf16.mxu0 %v1367
    %1397 = vmatpush1.bf16.msra.mxu0 %v1366
    %1398 = vmatprep.subr.bf16.mxu0 %v1365
    %1399 = vmatpush1.bf16.msra.mxu0 %v1364
    %1400 = vmatprep.subr.bf16.mxu0 %v1363
    %1401 = vmatpush1.bf16.msra.mxu0 %v1362
    %1402 = vmatprep.subr.bf16.mxu0 %v1361
    %1403 = vmatpush1.bf16.msra.mxu0 %v1360
    %1404 = vmatprep.subr.bf16.mxu0 %v1359
    %1405 = vmatpush1.bf16.msra.mxu0 %v1358
    %1406 = vmatprep.subr.bf16.mxu0 0
    %1407 = vmatpush2.bf16.msra.mxu0 0
    %1408 = vmatprep.subr.bf16.mxu0 0
    %1409 = vmatpush2.bf16.msra.mxu0 0
    %1410 = vmatprep.subr.bf16.mxu0 0
    %1411 = vmatpush2.bf16.msra.mxu0 0
    %1412 = vmatprep.subr.bf16.mxu0 0
    %1413 = vmatpush2.bf16.msra.mxu0 0
    %1414 = vmatprep.subr.bf16.mxu0 0
    %1415 = vmatpush2.bf16.msra.mxu0 0
    %1416 = vmatprep.subr.bf16.mxu0 0
    %1417 = vmatpush2.bf16.msra.mxu0 0
    %1418 = vmatprep.subr.bf16.mxu0 0
    %1419 = vmatpush2.bf16.msra.mxu0 0
    %1420 = vmatprep.subr.bf16.mxu0 0
    %1421 = vmatpush2.bf16.msra.mxu0 0
    %1422 = vmatprep.mubr.bf16.mxu0 0
    %1423 = vmatmul.mubr.bf16.gmra.mxu0 %v1275
    %v1424 = vpop.f32.mrf.mxu0
    %v1425 = vadd.f32 0.0, %v1424
    %v1426 = vpop.f32.mrf.mxu0
    %v1427 = vadd.f32 0.0, %v1426
    %v1428 = vpop.f32.mrf.mxu0
    %v1429 = vadd.f32 0.0, %v1428
    %v1430 = vpop.f32.mrf.mxu0
    %v1431 = vadd.f32 0.0, %v1430
    %1432 = vdwg.mxu0
    %v1449 = vunpack.c.l.b16 %v1277
    %v1450 = vunpack.c.h.b16 %v1277
    %v1451 = vunpack.c.l.b16 %v1278
    %v1452 = vunpack.c.h.b16 %v1278
    %v1453 = vunpack.c.l.b16 %v1279
    %v1454 = vunpack.c.h.b16 %v1279
    %v1455 = vunpack.c.l.b16 %v1280
    %v1456 = vunpack.c.h.b16 %v1280
    %v1457 = vunpack.c.l.b16 %v1281
    %v1458 = vunpack.c.h.b16 %v1281
    %v1459 = vunpack.c.l.b16 %v1282
    %v1460 = vunpack.c.h.b16 %v1282
    %v1461 = vunpack.c.l.b16 %v1283
    %v1462 = vunpack.c.h.b16 %v1283
    %v1463 = vunpack.c.l.b16 %v1284
    %v1464 = vunpack.c.h.b16 %v1284
    %v1465 = vunpack.c.l.b16 %v1285
    %v1466 = vunpack.c.h.b16 %v1285
    %v1467 = vunpack.c.l.b16 %v1286
    %v1468 = vunpack.c.h.b16 %v1286
    %v1469 = vunpack.c.l.b16 %v1287
    %v1470 = vunpack.c.h.b16 %v1287
    %v1471 = vunpack.c.l.b16 %v1288
    %v1472 = vunpack.c.h.b16 %v1288
    %v1473 = vunpack.c.l.b16 %v1289
    %v1474 = vunpack.c.h.b16 %v1289
    %v1475 = vunpack.c.l.b16 %v1290
    %v1476 = vunpack.c.h.b16 %v1290
    %v1477 = vunpack.c.l.b16 %v1291
    %v1478 = vunpack.c.h.b16 %v1291
    %v1479 = vunpack.c.l.b16 %v1292
    %v1480 = vunpack.c.h.b16 %v1292
    %v1481 = vpack.c.b16 %v1451, %v1449
    %v1482 = vpack.c.b16 %v1452, %v1450
    %v1483 = vpack.c.b16 %v1455, %v1453
    %v1484 = vpack.c.b16 %v1456, %v1454
    %v1485 = vpack.c.b16 %v1459, %v1457
    %v1486 = vpack.c.b16 %v1460, %v1458
    %v1487 = vpack.c.b16 %v1463, %v1461
    %v1488 = vpack.c.b16 %v1464, %v1462
    %v1489 = vpack.c.b16 %v1467, %v1465
    %v1490 = vpack.c.b16 %v1468, %v1466
    %v1491 = vpack.c.b16 %v1471, %v1469
    %v1492 = vpack.c.b16 %v1472, %v1470
    %v1493 = vpack.c.b16 %v1475, %v1473
    %v1494 = vpack.c.b16 %v1476, %v1474
    %v1495 = vpack.c.b16 %v1479, %v1477
    %v1496 = vpack.c.b16 %v1480, %v1478
    %1513 = vmatprep.subr.bf16.mxu0 %v1496
    %1514 = vmatpush1.bf16.msra.mxu0 %v1495
    %1515 = vmatprep.subr.bf16.mxu0 %v1494
    %1516 = vmatpush1.bf16.msra.mxu0 %v1493
    %1517 = vmatprep.subr.bf16.mxu0 %v1492
    %1518 = vmatpush1.bf16.msra.mxu0 %v1491
    %1519 = vmatprep.subr.bf16.mxu0 %v1490
    %1520 = vmatpush1.bf16.msra.mxu0 %v1489
    %1521 = vmatprep.subr.bf16.mxu0 %v1488
    %1522 = vmatpush1.bf16.msra.mxu0 %v1487
    %1523 = vmatprep.subr.bf16.mxu0 %v1486
    %1524 = vmatpush1.bf16.msra.mxu0 %v1485
    %1525 = vmatprep.subr.bf16.mxu0 %v1484
    %1526 = vmatpush1.bf16.msra.mxu0 %v1483
    %1527 = vmatprep.subr.bf16.mxu0 %v1482
    %1528 = vmatpush1.bf16.msra.mxu0 %v1481
    %1529 = vmatprep.subr.bf16.mxu0 0
    %1530 = vmatpush2.bf16.msra.mxu0 0
    %1531 = vmatprep.subr.bf16.mxu0 0
    %1532 = vmatpush2.bf16.msra.mxu0 0
    %1533 = vmatprep.subr.bf16.mxu0 0
    %1534 = vmatpush2.bf16.msra.mxu0 0
    %1535 = vmatprep.subr.bf16.mxu0 0
    %1536 = vmatpush2.bf16.msra.mxu0 0
    %1537 = vmatprep.subr.bf16.mxu0 0
    %1538 = vmatpush2.bf16.msra.mxu0 0
    %1539 = vmatprep.subr.bf16.mxu0 0
    %1540 = vmatpush2.bf16.msra.mxu0 0
    %1541 = vmatprep.subr.bf16.mxu0 0
    %1542 = vmatpush2.bf16.msra.mxu0 0
    %1543 = vmatprep.subr.bf16.mxu0 0
    %1544 = vmatpush2.bf16.msra.mxu0 0
    %1545 = vmatprep.mubr.bf16.mxu0 0
    %1546 = vmatmul.mubr.bf16.gmra.mxu0 %v1273
    %v1547 = vpop.f32.mrf.mxu0
    %v1548 = vadd.f32 %v1425, %v1547
    %v1549 = vpop.f32.mrf.mxu0
    %v1550 = vadd.f32 %v1427, %v1549
    %v1551 = vpop.f32.mrf.mxu0
    %v1552 = vadd.f32 %v1429, %v1551
    %v1553 = vpop.f32.mrf.mxu0
    %v1554 = vadd.f32 %v1431, %v1553
    %1555 = vdwg.mxu0
    %vm1556 = vsmask.f32 7424
    %v1558 = vshrl.u32 %v1273, 16
    %v1560 = vshll.u32 %v1273, 16
    %v1562 = vrot.slane %v1560, 1
    %v1563 = vor.u32 %v1558, %v1562
    %v1565 = vshll.u32 %v1274, 16
    %v1567 = vrot.slane %v1565, 1
    %v1568 = vsel %vm1556, %v1563, %v1567
    %1570 = vmatprep.subr.bf16.mxu0 %v1373
    %1571 = vmatpush1.bf16.msra.mxu0 %v1372
    %1572 = vmatprep.subr.bf16.mxu0 %v1371
    %1573 = vmatpush1.bf16.msra.mxu0 %v1370
    %1574 = vmatprep.subr.bf16.mxu0 %v1369
    %1575 = vmatpush1.bf16.msra.mxu0 %v1368
    %1576 = vmatprep.subr.bf16.mxu0 %v1367
    %1577 = vmatpush1.bf16.msra.mxu0 %v1366
    %1578 = vmatprep.subr.bf16.mxu0 %v1365
    %1579 = vmatpush1.bf16.msra.mxu0 %v1364
    %1580 = vmatprep.subr.bf16.mxu0 %v1363
    %1581 = vmatpush1.bf16.msra.mxu0 %v1362
    %1582 = vmatprep.subr.bf16.mxu0 %v1361
    %1583 = vmatpush1.bf16.msra.mxu0 %v1360
    %1584 = vmatprep.subr.bf16.mxu0 %v1359
    %1585 = vmatpush1.bf16.msra.mxu0 %v1358
    %1586 = vmatprep.subr.bf16.mxu0 0
    %1587 = vmatpush2.bf16.msra.mxu0 0
    %1588 = vmatprep.subr.bf16.mxu0 0
    %1589 = vmatpush2.bf16.msra.mxu0 0
    %1590 = vmatprep.subr.bf16.mxu0 0
    %1591 = vmatpush2.bf16.msra.mxu0 0
    %1592 = vmatprep.subr.bf16.mxu0 0
    %1593 = vmatpush2.bf16.msra.mxu0 0
    %1594 = vmatprep.subr.bf16.mxu0 0
    %1595 = vmatpush2.bf16.msra.mxu0 0
    %1596 = vmatprep.subr.bf16.mxu0 0
    %1597 = vmatpush2.bf16.msra.mxu0 0
    %1598 = vmatprep.subr.bf16.mxu0 0
    %1599 = vmatpush2.bf16.msra.mxu0 0
    %1600 = vmatprep.subr.bf16.mxu0 0
    %1601 = vmatpush2.bf16.msra.mxu0 0
    %1602 = vmatprep.mubr.bf16.mxu0 0
    %1603 = vmatmul.mubr.bf16.gmra.mxu0 %v1568
    %v1604 = vpop.f32.mrf.mxu0
    %v1605 = vadd.f32 0.0, %v1604
    %v1606 = vpop.f32.mrf.mxu0
    %v1607 = vadd.f32 0.0, %v1606
    %v1608 = vpop.f32.mrf.mxu0
    %v1609 = vadd.f32 0.0, %v1608
    %v1610 = vpop.f32.mrf.mxu0
    %v1611 = vadd.f32 0.0, %v1610
    %1612 = vdwg.mxu0
    %1613 = vmatprep.subr.bf16.mxu0 %v1496
    %1614 = vmatpush1.bf16.msra.mxu0 %v1495
    %1615 = vmatprep.subr.bf16.mxu0 %v1494
    %1616 = vmatpush1.bf16.msra.mxu0 %v1493
    %1617 = vmatprep.subr.bf16.mxu0 %v1492
    %1618 = vmatpush1.bf16.msra.mxu0 %v1491
    %1619 = vmatprep.subr.bf16.mxu0 %v1490
    %1620 = vmatpush1.bf16.msra.mxu0 %v1489
    %1621 = vmatprep.subr.bf16.mxu0 %v1488
    %1622 = vmatpush1.bf16.msra.mxu0 %v1487
    %1623 = vmatprep.subr.bf16.mxu0 %v1486
    %1624 = vmatpush1.bf16.msra.mxu0 %v1485
    %1625 = vmatprep.subr.bf16.mxu0 %v1484
    %1626 = vmatpush1.bf16.msra.mxu0 %v1483
    %1627 = vmatprep.subr.bf16.mxu0 %v1482
    %1628 = vmatpush1.bf16.msra.mxu0 %v1481
    %1629 = vmatprep.subr.bf16.mxu0 0
    %1630 = vmatpush2.bf16.msra.mxu0 0
    %1631 = vmatprep.subr.bf16.mxu0 0
    %1632 = vmatpush2.bf16.msra.mxu0 0
    %1633 = vmatprep.subr.bf16.mxu0 0
    %1634 = vmatpush2.bf16.msra.mxu0 0
    %1635 = vmatprep.subr.bf16.mxu0 0
    %1636 = vmatpush2.bf16.msra.mxu0 0
    %1637 = vmatprep.subr.bf16.mxu0 0
    %1638 = vmatpush2.bf16.msra.mxu0 0
    %1639 = vmatprep.subr.bf16.mxu0 0
    %1640 = vmatpush2.bf16.msra.mxu0 0
    %1641 = vmatprep.subr.bf16.mxu0 0
    %1642 = vmatpush2.bf16.msra.mxu0 0
    %1643 = vmatprep.subr.bf16.mxu0 0
    %1644 = vmatpush2.bf16.msra.mxu0 0
    %1645 = vmatprep.mubr.bf16.mxu0 0
    %1646 = vmatmul.mubr.bf16.gmra.mxu0 %v1275
    %v1647 = vpop.f32.mrf.mxu0
    %v1648 = vadd.f32 %v1605, %v1647
    %v1649 = vpop.f32.mrf.mxu0
    %v1650 = vadd.f32 %v1607, %v1649
    %v1651 = vpop.f32.mrf.mxu0
    %v1652 = vadd.f32 %v1609, %v1651
    %v1653 = vpop.f32.mrf.mxu0
    %v1654 = vadd.f32 %v1611, %v1653
    %1655 = vdwg.mxu0
    %s1656 = scalar_lea.vmem %s3, 256
    %v1657 = vld [vmem:[%s1656] sm:$0xff]
    %v1658 = vld [vmem:[%s1656 + $0x8] sm:$0xff]
    %v1659 = vld [vmem:[%s1656 + $0x10] sm:$0xff]
    %v1660 = vld [vmem:[%s1656 + $0x18] sm:$0xff]
    %v1661 = vld [vmem:[%s1656 + $0x20] sm:$0xff]
    %v1662 = vld [vmem:[%s1656 + $0x28] sm:$0xff]
    %v1663 = vld [vmem:[%s1656 + $0x30] sm:$0xff]
    %v1664 = vld [vmem:[%s1656 + $0x38] sm:$0xff]
    %v1665 = vld [vmem:[%s1656 + $0x40] sm:$0xff]
    %v1666 = vld [vmem:[%s1656 + $0x48] sm:$0xff]
    %v1667 = vld [vmem:[%s1656 + $0x50] sm:$0xff]
    %v1668 = vld [vmem:[%s1656 + $0x58] sm:$0xff]
    %v1669 = vld [vmem:[%s1656 + $0x60] sm:$0xff]
    %v1670 = vld [vmem:[%s1656 + $0x68] sm:$0xff]
    %v1671 = vld [vmem:[%s1656 + $0x70] sm:$0xff]
    %v1672 = vld [vmem:[%s1656 + $0x78] sm:$0xff]
    %v1689 = vunpack.c.l.b16 %v1657
    %v1690 = vunpack.c.h.b16 %v1657
    %v1691 = vunpack.c.l.b16 %v1658
    %v1692 = vunpack.c.h.b16 %v1658
    %v1693 = vunpack.c.l.b16 %v1659
    %v1694 = vunpack.c.h.b16 %v1659
    %v1695 = vunpack.c.l.b16 %v1660
    %v1696 = vunpack.c.h.b16 %v1660
    %v1697 = vunpack.c.l.b16 %v1661
    %v1698 = vunpack.c.h.b16 %v1661
    %v1699 = vunpack.c.l.b16 %v1662
    %v1700 = vunpack.c.h.b16 %v1662
    %v1701 = vunpack.c.l.b16 %v1663
    %v1702 = vunpack.c.h.b16 %v1663
    %v1703 = vunpack.c.l.b16 %v1664
    %v1704 = vunpack.c.h.b16 %v1664
    %v1705 = vunpack.c.l.b16 %v1665
    %v1706 = vunpack.c.h.b16 %v1665
    %v1707 = vunpack.c.l.b16 %v1666
    %v1708 = vunpack.c.h.b16 %v1666
    %v1709 = vunpack.c.l.b16 %v1667
    %v1710 = vunpack.c.h.b16 %v1667
    %v1711 = vunpack.c.l.b16 %v1668
    %v1712 = vunpack.c.h.b16 %v1668
    %v1713 = vunpack.c.l.b16 %v1669
    %v1714 = vunpack.c.h.b16 %v1669
    %v1715 = vunpack.c.l.b16 %v1670
    %v1716 = vunpack.c.h.b16 %v1670
    %v1717 = vunpack.c.l.b16 %v1671
    %v1718 = vunpack.c.h.b16 %v1671
    %v1719 = vunpack.c.l.b16 %v1672
    %v1720 = vunpack.c.h.b16 %v1672
    %v1721 = vpack.c.b16 %v1691, %v1689
    %v1722 = vpack.c.b16 %v1692, %v1690
    %v1723 = vpack.c.b16 %v1695, %v1693
    %v1724 = vpack.c.b16 %v1696, %v1694
    %v1725 = vpack.c.b16 %v1699, %v1697
    %v1726 = vpack.c.b16 %v1700, %v1698
    %v1727 = vpack.c.b16 %v1703, %v1701
    %v1728 = vpack.c.b16 %v1704, %v1702
    %v1729 = vpack.c.b16 %v1707, %v1705
    %v1730 = vpack.c.b16 %v1708, %v1706
    %v1731 = vpack.c.b16 %v1711, %v1709
    %v1732 = vpack.c.b16 %v1712, %v1710
    %v1733 = vpack.c.b16 %v1715, %v1713
    %v1734 = vpack.c.b16 %v1716, %v1714
    %v1735 = vpack.c.b16 %v1719, %v1717
    %v1736 = vpack.c.b16 %v1720, %v1718
    %1753 = vmatprep.subr.bf16.mxu0 %v1736
    %1754 = vmatpush1.bf16.msra.mxu0 %v1735
    %1755 = vmatprep.subr.bf16.mxu0 %v1734
    %1756 = vmatpush1.bf16.msra.mxu0 %v1733
    %1757 = vmatprep.subr.bf16.mxu0 %v1732
    %1758 = vmatpush1.bf16.msra.mxu0 %v1731
    %1759 = vmatprep.subr.bf16.mxu0 %v1730
    %1760 = vmatpush1.bf16.msra.mxu0 %v1729
    %1761 = vmatprep.subr.bf16.mxu0 %v1728
    %1762 = vmatpush1.bf16.msra.mxu0 %v1727
    %1763 = vmatprep.subr.bf16.mxu0 %v1726
    %1764 = vmatpush1.bf16.msra.mxu0 %v1725
    %1765 = vmatprep.subr.bf16.mxu0 %v1724
    %1766 = vmatpush1.bf16.msra.mxu0 %v1723
    %1767 = vmatprep.subr.bf16.mxu0 %v1722
    %1768 = vmatpush1.bf16.msra.mxu0 %v1721
    %1769 = vmatprep.subr.bf16.mxu0 0
    %1770 = vmatpush2.bf16.msra.mxu0 0
    %1771 = vmatprep.subr.bf16.mxu0 0
    %1772 = vmatpush2.bf16.msra.mxu0 0
    %1773 = vmatprep.subr.bf16.mxu0 0
    %1774 = vmatpush2.bf16.msra.mxu0 0
    %1775 = vmatprep.subr.bf16.mxu0 0
    %1776 = vmatpush2.bf16.msra.mxu0 0
    %1777 = vmatprep.subr.bf16.mxu0 0
    %1778 = vmatpush2.bf16.msra.mxu0 0
    %1779 = vmatprep.subr.bf16.mxu0 0
    %1780 = vmatpush2.bf16.msra.mxu0 0
    %1781 = vmatprep.subr.bf16.mxu0 0
    %1782 = vmatpush2.bf16.msra.mxu0 0
    %1783 = vmatprep.subr.bf16.mxu0 0
    %1784 = vmatpush2.bf16.msra.mxu0 0
    %1785 = vmatprep.mubr.bf16.mxu0 0
    %1786 = vmatmul.mubr.bf16.gmra.mxu0 %v1568
    %v1787 = vpop.f32.mrf.mxu0
    %v1788 = vadd.f32 0.0, %v1787
    %v1789 = vpop.f32.mrf.mxu0
    %v1790 = vadd.f32 0.0, %v1789
    %v1791 = vpop.f32.mrf.mxu0
    %v1792 = vadd.f32 0.0, %v1791
    %v1793 = vpop.f32.mrf.mxu0
    %v1794 = vadd.f32 0.0, %v1793
    %1795 = vdwg.mxu0
    %v1796 = vadd.f32 %v1548, %v1788
    %v1797 = vadd.f32 %v1550, %v1790
    %v1798 = vadd.f32 %v1552, %v1792
    %v1799 = vadd.f32 %v1554, %v1794
    %v1801 = vshrl.u32 %v1275, 16
    %v1803 = vshll.u32 %v1275, 16
    %v1805 = vrot.slane %v1803, 1
    %v1806 = vor.u32 %v1801, %v1805
    %v1808 = vshll.u32 %v1276, 16
    %v1810 = vrot.slane %v1808, 1
    %v1811 = vsel %vm1556, %v1806, %v1810
    %1813 = vmatprep.subr.bf16.mxu0 %v1736
    %1814 = vmatpush1.bf16.msra.mxu0 %v1735
    %1815 = vmatprep.subr.bf16.mxu0 %v1734
    %1816 = vmatpush1.bf16.msra.mxu0 %v1733
    %1817 = vmatprep.subr.bf16.mxu0 %v1732
    %1818 = vmatpush1.bf16.msra.mxu0 %v1731
    %1819 = vmatprep.subr.bf16.mxu0 %v1730
    %1820 = vmatpush1.bf16.msra.mxu0 %v1729
    %1821 = vmatprep.subr.bf16.mxu0 %v1728
    %1822 = vmatpush1.bf16.msra.mxu0 %v1727
    %1823 = vmatprep.subr.bf16.mxu0 %v1726
    %1824 = vmatpush1.bf16.msra.mxu0 %v1725
    %1825 = vmatprep.subr.bf16.mxu0 %v1724
    %1826 = vmatpush1.bf16.msra.mxu0 %v1723
    %1827 = vmatprep.subr.bf16.mxu0 %v1722
    %1828 = vmatpush1.bf16.msra.mxu0 %v1721
    %1829 = vmatprep.subr.bf16.mxu0 0
    %1830 = vmatpush2.bf16.msra.mxu0 0
    %1831 = vmatprep.subr.bf16.mxu0 0
    %1832 = vmatpush2.bf16.msra.mxu0 0
    %1833 = vmatprep.subr.bf16.mxu0 0
    %1834 = vmatpush2.bf16.msra.mxu0 0
    %1835 = vmatprep.subr.bf16.mxu0 0
    %1836 = vmatpush2.bf16.msra.mxu0 0
    %1837 = vmatprep.subr.bf16.mxu0 0
    %1838 = vmatpush2.bf16.msra.mxu0 0
    %1839 = vmatprep.subr.bf16.mxu0 0
    %1840 = vmatpush2.bf16.msra.mxu0 0
    %1841 = vmatprep.subr.bf16.mxu0 0
    %1842 = vmatpush2.bf16.msra.mxu0 0
    %1843 = vmatprep.subr.bf16.mxu0 0
    %1844 = vmatpush2.bf16.msra.mxu0 0
    %1845 = vmatprep.mubr.bf16.mxu0 0
    %1846 = vmatmul.mubr.bf16.gmra.mxu0 %v1811
    %v1847 = vpop.f32.mrf.mxu0
    %v1848 = vadd.f32 0.0, %v1847
    %v1849 = vpop.f32.mrf.mxu0
    %v1850 = vadd.f32 0.0, %v1849
    %v1851 = vpop.f32.mrf.mxu0
    %v1852 = vadd.f32 0.0, %v1851
    %v1853 = vpop.f32.mrf.mxu0
    %v1854 = vadd.f32 0.0, %v1853
    %1855 = vdwg.mxu0
    %v1856 = vadd.f32 %v1648, %v1848
    %v1857 = vadd.f32 %v1650, %v1850
    %v1858 = vadd.f32 %v1652, %v1852
    %v1859 = vadd.f32 %v1654, %v1854
    %s1860 = scalar_lea.vmem %s3, 384
    %v1861 = vld [vmem:[%s1860] sm:$0xff]
    %v1862 = vld [vmem:[%s1860 + $0x8] sm:$0xff]
    %v1863 = vld [vmem:[%s1860 + $0x10] sm:$0xff]
    %v1864 = vld [vmem:[%s1860 + $0x18] sm:$0xff]
    %v1865 = vld [vmem:[%s1860 + $0x20] sm:$0xff]
    %v1866 = vld [vmem:[%s1860 + $0x28] sm:$0xff]
    %v1867 = vld [vmem:[%s1860 + $0x30] sm:$0xff]
    %v1868 = vld [vmem:[%s1860 + $0x38] sm:$0xff]
    %v1869 = vld [vmem:[%s1860 + $0x40] sm:$0xff]
    %v1870 = vld [vmem:[%s1860 + $0x48] sm:$0xff]
    %v1871 = vld [vmem:[%s1860 + $0x50] sm:$0xff]
    %v1872 = vld [vmem:[%s1860 + $0x58] sm:$0xff]
    %v1873 = vld [vmem:[%s1860 + $0x60] sm:$0xff]
    %v1874 = vld [vmem:[%s1860 + $0x68] sm:$0xff]
    %v1875 = vld [vmem:[%s1860 + $0x70] sm:$0xff]
    %v1876 = vld [vmem:[%s1860 + $0x78] sm:$0xff]
    %v1893 = vunpack.c.l.b16 %v1861
    %v1894 = vunpack.c.h.b16 %v1861
    %v1895 = vunpack.c.l.b16 %v1862
    %v1896 = vunpack.c.h.b16 %v1862
    %v1897 = vunpack.c.l.b16 %v1863
    %v1898 = vunpack.c.h.b16 %v1863
    %v1899 = vunpack.c.l.b16 %v1864
    %v1900 = vunpack.c.h.b16 %v1864
    %v1901 = vunpack.c.l.b16 %v1865
    %v1902 = vunpack.c.h.b16 %v1865
    %v1903 = vunpack.c.l.b16 %v1866
    %v1904 = vunpack.c.h.b16 %v1866
    %v1905 = vunpack.c.l.b16 %v1867
    %v1906 = vunpack.c.h.b16 %v1867
    %v1907 = vunpack.c.l.b16 %v1868
    %v1908 = vunpack.c.h.b16 %v1868
    %v1909 = vunpack.c.l.b16 %v1869
    %v1910 = vunpack.c.h.b16 %v1869
    %v1911 = vunpack.c.l.b16 %v1870
    %v1912 = vunpack.c.h.b16 %v1870
    %v1913 = vunpack.c.l.b16 %v1871
    %v1914 = vunpack.c.h.b16 %v1871
    %v1915 = vunpack.c.l.b16 %v1872
    %v1916 = vunpack.c.h.b16 %v1872
    %v1917 = vunpack.c.l.b16 %v1873
    %v1918 = vunpack.c.h.b16 %v1873
    %v1919 = vunpack.c.l.b16 %v1874
    %v1920 = vunpack.c.h.b16 %v1874
    %v1921 = vunpack.c.l.b16 %v1875
    %v1922 = vunpack.c.h.b16 %v1875
    %v1923 = vunpack.c.l.b16 %v1876
    %v1924 = vunpack.c.h.b16 %v1876
    %v1925 = vpack.c.b16 %v1895, %v1893
    %v1926 = vpack.c.b16 %v1896, %v1894
    %v1927 = vpack.c.b16 %v1899, %v1897
    %v1928 = vpack.c.b16 %v1900, %v1898
    %v1929 = vpack.c.b16 %v1903, %v1901
    %v1930 = vpack.c.b16 %v1904, %v1902
    %v1931 = vpack.c.b16 %v1907, %v1905
    %v1932 = vpack.c.b16 %v1908, %v1906
    %v1933 = vpack.c.b16 %v1911, %v1909
    %v1934 = vpack.c.b16 %v1912, %v1910
    %v1935 = vpack.c.b16 %v1915, %v1913
    %v1936 = vpack.c.b16 %v1916, %v1914
    %v1937 = vpack.c.b16 %v1919, %v1917
    %v1938 = vpack.c.b16 %v1920, %v1918
    %v1939 = vpack.c.b16 %v1923, %v1921
    %v1940 = vpack.c.b16 %v1924, %v1922
    %1957 = vmatprep.subr.bf16.mxu0 %v1940
    %1958 = vmatpush1.bf16.msra.mxu0 %v1939
    %1959 = vmatprep.subr.bf16.mxu0 %v1938
    %1960 = vmatpush1.bf16.msra.mxu0 %v1937
    %1961 = vmatprep.subr.bf16.mxu0 %v1936
    %1962 = vmatpush1.bf16.msra.mxu0 %v1935
    %1963 = vmatprep.subr.bf16.mxu0 %v1934
    %1964 = vmatpush1.bf16.msra.mxu0 %v1933
    %1965 = vmatprep.subr.bf16.mxu0 %v1932
    %1966 = vmatpush1.bf16.msra.mxu0 %v1931
    %1967 = vmatprep.subr.bf16.mxu0 %v1930
    %1968 = vmatpush1.bf16.msra.mxu0 %v1929
    %1969 = vmatprep.subr.bf16.mxu0 %v1928
    %1970 = vmatpush1.bf16.msra.mxu0 %v1927
    %1971 = vmatprep.subr.bf16.mxu0 %v1926
    %1972 = vmatpush1.bf16.msra.mxu0 %v1925
    %1973 = vmatprep.subr.bf16.mxu0 0
    %1974 = vmatpush2.bf16.msra.mxu0 0
    %1975 = vmatprep.subr.bf16.mxu0 0
    %1976 = vmatpush2.bf16.msra.mxu0 0
    %1977 = vmatprep.subr.bf16.mxu0 0
    %1978 = vmatpush2.bf16.msra.mxu0 0
    %1979 = vmatprep.subr.bf16.mxu0 0
    %1980 = vmatpush2.bf16.msra.mxu0 0
    %1981 = vmatprep.subr.bf16.mxu0 0
    %1982 = vmatpush2.bf16.msra.mxu0 0
    %1983 = vmatprep.subr.bf16.mxu0 0
    %1984 = vmatpush2.bf16.msra.mxu0 0
    %1985 = vmatprep.subr.bf16.mxu0 0
    %1986 = vmatpush2.bf16.msra.mxu0 0
    %1987 = vmatprep.subr.bf16.mxu0 0
    %1988 = vmatpush2.bf16.msra.mxu0 0
    %1989 = vmatprep.mubr.bf16.mxu0 0
    %1990 = vmatmul.mubr.bf16.gmra.mxu0 %v1811
    %v1991 = vpop.f32.mrf.mxu0
    %v1992 = vadd.f32 0.0, %v1991
    %v1993 = vpop.f32.mrf.mxu0
    %v1994 = vadd.f32 0.0, %v1993
    %v1995 = vpop.f32.mrf.mxu0
    %v1996 = vadd.f32 0.0, %v1995
    %v1997 = vpop.f32.mrf.mxu0
    %v1998 = vadd.f32 0.0, %v1997
    %1999 = vdwg.mxu0
    %v2000 = vadd.f32 %v1796, %v1992
    %v2001 = vadd.f32 %v1797, %v1994
    %v2002 = vadd.f32 %v1798, %v1996
    %v2003 = vadd.f32 %v1799, %v1998
    %vm2006 = vcmask 1046528
    %v2007 = vrot.slane %v1273, 1
    %v2008 = vrot.slane %v1274, 1
    %v2009 = vsel %vm2006, %v2007, %v2008
    %2011 = vmatprep.subr.bf16.mxu0 %v1940
    %2012 = vmatpush1.bf16.msra.mxu0 %v1939
    %2013 = vmatprep.subr.bf16.mxu0 %v1938
    %2014 = vmatpush1.bf16.msra.mxu0 %v1937
    %2015 = vmatprep.subr.bf16.mxu0 %v1936
    %2016 = vmatpush1.bf16.msra.mxu0 %v1935
    %2017 = vmatprep.subr.bf16.mxu0 %v1934
    %2018 = vmatpush1.bf16.msra.mxu0 %v1933
    %2019 = vmatprep.subr.bf16.mxu0 %v1932
    %2020 = vmatpush1.bf16.msra.mxu0 %v1931
    %2021 = vmatprep.subr.bf16.mxu0 %v1930
    %2022 = vmatpush1.bf16.msra.mxu0 %v1929
    %2023 = vmatprep.subr.bf16.mxu0 %v1928
    %2024 = vmatpush1.bf16.msra.mxu0 %v1927
    %2025 = vmatprep.subr.bf16.mxu0 %v1926
    %2026 = vmatpush1.bf16.msra.mxu0 %v1925
    %2027 = vmatprep.subr.bf16.mxu0 0
    %2028 = vmatpush2.bf16.msra.mxu0 0
    %2029 = vmatprep.subr.bf16.mxu0 0
    %2030 = vmatpush2.bf16.msra.mxu0 0
    %2031 = vmatprep.subr.bf16.mxu0 0
    %2032 = vmatpush2.bf16.msra.mxu0 0
    %2033 = vmatprep.subr.bf16.mxu0 0
    %2034 = vmatpush2.bf16.msra.mxu0 0
    %2035 = vmatprep.subr.bf16.mxu0 0
    %2036 = vmatpush2.bf16.msra.mxu0 0
    %2037 = vmatprep.subr.bf16.mxu0 0
    %2038 = vmatpush2.bf16.msra.mxu0 0
    %2039 = vmatprep.subr.bf16.mxu0 0
    %2040 = vmatpush2.bf16.msra.mxu0 0
    %2041 = vmatprep.subr.bf16.mxu0 0
    %2042 = vmatpush2.bf16.msra.mxu0 0
    %2043 = vmatprep.mubr.bf16.mxu0 0
    %2044 = vmatmul.mubr.bf16.gmra.mxu0 %v2009
    %v2045 = vpop.f32.mrf.mxu0
    %v2046 = vadd.f32 0.0, %v2045
    %v2047 = vpop.f32.mrf.mxu0
    %v2048 = vadd.f32 0.0, %v2047
    %v2049 = vpop.f32.mrf.mxu0
    %v2050 = vadd.f32 0.0, %v2049
    %v2051 = vpop.f32.mrf.mxu0
    %v2052 = vadd.f32 0.0, %v2051
    %2053 = vdwg.mxu0
    %v2054 = vadd.f32 %v1856, %v2046
    %v2055 = vadd.f32 %v1857, %v2048
    %v2056 = vadd.f32 %v1858, %v2050
    %v2057 = vadd.f32 %v1859, %v2052
    %s2058 = scalar_lea.vmem %s3, 512
    %v2059 = vld [vmem:[%s2058] sm:$0xff]
    %v2060 = vld [vmem:[%s2058 + $0x8] sm:$0xff]
    %v2061 = vld [vmem:[%s2058 + $0x10] sm:$0xff]
    %v2062 = vld [vmem:[%s2058 + $0x18] sm:$0xff]
    %v2063 = vld [vmem:[%s2058 + $0x20] sm:$0xff]
    %v2064 = vld [vmem:[%s2058 + $0x28] sm:$0xff]
    %v2065 = vld [vmem:[%s2058 + $0x30] sm:$0xff]
    %v2066 = vld [vmem:[%s2058 + $0x38] sm:$0xff]
    %v2067 = vld [vmem:[%s2058 + $0x40] sm:$0xff]
    %v2068 = vld [vmem:[%s2058 + $0x48] sm:$0xff]
    %v2069 = vld [vmem:[%s2058 + $0x50] sm:$0xff]
    %v2070 = vld [vmem:[%s2058 + $0x58] sm:$0xff]
    %v2071 = vld [vmem:[%s2058 + $0x60] sm:$0xff]
    %v2072 = vld [vmem:[%s2058 + $0x68] sm:$0xff]
    %v2073 = vld [vmem:[%s2058 + $0x70] sm:$0xff]
    %v2074 = vld [vmem:[%s2058 + $0x78] sm:$0xff]
    %v2091 = vunpack.c.l.b16 %v2059
    %v2092 = vunpack.c.h.b16 %v2059
    %v2093 = vunpack.c.l.b16 %v2060
    %v2094 = vunpack.c.h.b16 %v2060
    %v2095 = vunpack.c.l.b16 %v2061
    %v2096 = vunpack.c.h.b16 %v2061
    %v2097 = vunpack.c.l.b16 %v2062
    %v2098 = vunpack.c.h.b16 %v2062
    %v2099 = vunpack.c.l.b16 %v2063
    %v2100 = vunpack.c.h.b16 %v2063
    %v2101 = vunpack.c.l.b16 %v2064
    %v2102 = vunpack.c.h.b16 %v2064
    %v2103 = vunpack.c.l.b16 %v2065
    %v2104 = vunpack.c.h.b16 %v2065
    %v2105 = vunpack.c.l.b16 %v2066
    %v2106 = vunpack.c.h.b16 %v2066
    %v2107 = vunpack.c.l.b16 %v2067
    %v2108 = vunpack.c.h.b16 %v2067
    %v2109 = vunpack.c.l.b16 %v2068
    %v2110 = vunpack.c.h.b16 %v2068
    %v2111 = vunpack.c.l.b16 %v2069
    %v2112 = vunpack.c.h.b16 %v2069
    %v2113 = vunpack.c.l.b16 %v2070
    %v2114 = vunpack.c.h.b16 %v2070
    %v2115 = vunpack.c.l.b16 %v2071
    %v2116 = vunpack.c.h.b16 %v2071
    %v2117 = vunpack.c.l.b16 %v2072
    %v2118 = vunpack.c.h.b16 %v2072
    %v2119 = vunpack.c.l.b16 %v2073
    %v2120 = vunpack.c.h.b16 %v2073
    %v2121 = vunpack.c.l.b16 %v2074
    %v2122 = vunpack.c.h.b16 %v2074
    %v2123 = vpack.c.b16 %v2093, %v2091
    %v2124 = vpack.c.b16 %v2094, %v2092
    %v2125 = vpack.c.b16 %v2097, %v2095
    %v2126 = vpack.c.b16 %v2098, %v2096
    %v2127 = vpack.c.b16 %v2101, %v2099
    %v2128 = vpack.c.b16 %v2102, %v2100
    %v2129 = vpack.c.b16 %v2105, %v2103
    %v2130 = vpack.c.b16 %v2106, %v2104
    %v2131 = vpack.c.b16 %v2109, %v2107
    %v2132 = vpack.c.b16 %v2110, %v2108
    %v2133 = vpack.c.b16 %v2113, %v2111
    %v2134 = vpack.c.b16 %v2114, %v2112
    %v2135 = vpack.c.b16 %v2117, %v2115
    %v2136 = vpack.c.b16 %v2118, %v2116
    %v2137 = vpack.c.b16 %v2121, %v2119
    %v2138 = vpack.c.b16 %v2122, %v2120
    %2155 = vmatprep.subr.bf16.mxu0 %v2138
    %2156 = vmatpush1.bf16.msra.mxu0 %v2137
    %2157 = vmatprep.subr.bf16.mxu0 %v2136
    %2158 = vmatpush1.bf16.msra.mxu0 %v2135
    %2159 = vmatprep.subr.bf16.mxu0 %v2134
    %2160 = vmatpush1.bf16.msra.mxu0 %v2133
    %2161 = vmatprep.subr.bf16.mxu0 %v2132
    %2162 = vmatpush1.bf16.msra.mxu0 %v2131
    %2163 = vmatprep.subr.bf16.mxu0 %v2130
    %2164 = vmatpush1.bf16.msra.mxu0 %v2129
    %2165 = vmatprep.subr.bf16.mxu0 %v2128
    %2166 = vmatpush1.bf16.msra.mxu0 %v2127
    %2167 = vmatprep.subr.bf16.mxu0 %v2126
    %2168 = vmatpush1.bf16.msra.mxu0 %v2125
    %2169 = vmatprep.subr.bf16.mxu0 %v2124
    %2170 = vmatpush1.bf16.msra.mxu0 %v2123
    %2171 = vmatprep.subr.bf16.mxu0 0
    %2172 = vmatpush2.bf16.msra.mxu0 0
    %2173 = vmatprep.subr.bf16.mxu0 0
    %2174 = vmatpush2.bf16.msra.mxu0 0
    %2175 = vmatprep.subr.bf16.mxu0 0
    %2176 = vmatpush2.bf16.msra.mxu0 0
    %2177 = vmatprep.subr.bf16.mxu0 0
    %2178 = vmatpush2.bf16.msra.mxu0 0
    %2179 = vmatprep.subr.bf16.mxu0 0
    %2180 = vmatpush2.bf16.msra.mxu0 0
    %2181 = vmatprep.subr.bf16.mxu0 0
    %2182 = vmatpush2.bf16.msra.mxu0 0
    %2183 = vmatprep.subr.bf16.mxu0 0
    %2184 = vmatpush2.bf16.msra.mxu0 0
    %2185 = vmatprep.subr.bf16.mxu0 0
    %2186 = vmatpush2.bf16.msra.mxu0 0
    %2187 = vmatprep.mubr.bf16.mxu0 0
    %2188 = vmatmul.mubr.bf16.gmra.mxu0 %v2009
    %v2189 = vpop.f32.mrf.mxu0
    %v2190 = vadd.f32 0.0, %v2189
    %v2191 = vpop.f32.mrf.mxu0
    %v2192 = vadd.f32 0.0, %v2191
    %v2193 = vpop.f32.mrf.mxu0
    %v2194 = vadd.f32 0.0, %v2193
    %v2195 = vpop.f32.mrf.mxu0
    %v2196 = vadd.f32 0.0, %v2195
    %2197 = vdwg.mxu0
    %v2198 = vadd.f32 %v2000, %v2190
    %v2199 = vadd.f32 %v2001, %v2192
    %v2200 = vadd.f32 %v2002, %v2194
    %v2201 = vadd.f32 %v2003, %v2196
    %v2204 = vrot.slane %v1275, 1
    %v2205 = vrot.slane %v1276, 1
    %v2206 = vsel %vm2006, %v2204, %v2205
    %2208 = vmatprep.subr.bf16.mxu0 %v2138
    %2209 = vmatpush1.bf16.msra.mxu0 %v2137
    %2210 = vmatprep.subr.bf16.mxu0 %v2136
    %2211 = vmatpush1.bf16.msra.mxu0 %v2135
    %2212 = vmatprep.subr.bf16.mxu0 %v2134
    %2213 = vmatpush1.bf16.msra.mxu0 %v2133
    %2214 = vmatprep.subr.bf16.mxu0 %v2132
    %2215 = vmatpush1.bf16.msra.mxu0 %v2131
    %2216 = vmatprep.subr.bf16.mxu0 %v2130
    %2217 = vmatpush1.bf16.msra.mxu0 %v2129
    %2218 = vmatprep.subr.bf16.mxu0 %v2128
    %2219 = vmatpush1.bf16.msra.mxu0 %v2127
    %2220 = vmatprep.subr.bf16.mxu0 %v2126
    %2221 = vmatpush1.bf16.msra.mxu0 %v2125
    %2222 = vmatprep.subr.bf16.mxu0 %v2124
    %2223 = vmatpush1.bf16.msra.mxu0 %v2123
    %2224 = vmatprep.subr.bf16.mxu0 0
    %2225 = vmatpush2.bf16.msra.mxu0 0
    %2226 = vmatprep.subr.bf16.mxu0 0
    %2227 = vmatpush2.bf16.msra.mxu0 0
    %2228 = vmatprep.subr.bf16.mxu0 0
    %2229 = vmatpush2.bf16.msra.mxu0 0
    %2230 = vmatprep.subr.bf16.mxu0 0
    %2231 = vmatpush2.bf16.msra.mxu0 0
    %2232 = vmatprep.subr.bf16.mxu0 0
    %2233 = vmatpush2.bf16.msra.mxu0 0
    %2234 = vmatprep.subr.bf16.mxu0 0
    %2235 = vmatpush2.bf16.msra.mxu0 0
    %2236 = vmatprep.subr.bf16.mxu0 0
    %2237 = vmatpush2.bf16.msra.mxu0 0
    %2238 = vmatprep.subr.bf16.mxu0 0
    %2239 = vmatpush2.bf16.msra.mxu0 0
    %2240 = vmatprep.mubr.bf16.mxu0 0
    %2241 = vmatmul.mubr.bf16.gmra.mxu0 %v2206
    %v2242 = vpop.f32.mrf.mxu0
    %v2243 = vadd.f32 0.0, %v2242
    %v2244 = vpop.f32.mrf.mxu0
    %v2245 = vadd.f32 0.0, %v2244
    %v2246 = vpop.f32.mrf.mxu0
    %v2247 = vadd.f32 0.0, %v2246
    %v2248 = vpop.f32.mrf.mxu0
    %v2249 = vadd.f32 0.0, %v2248
    %2250 = vdwg.mxu0
    %v2251 = vadd.f32 %v2054, %v2243
    %v2252 = vadd.f32 %v2055, %v2245
    %v2253 = vadd.f32 %v2056, %v2247
    %v2254 = vadd.f32 %v2057, %v2249
    %v2255 = vld [vmem:[%s4] sm:$0x3]
    %v2257 = vlaneseq
    %v2258 = vshrl.u32 %v2257, 7
    %v2259 = vsub.s32 0, %v2258
    %v2260 = vrot.slane %v2255, %v2259
    %v2261 = vlaneseq
    %v2262 = vshrl.u32 %v2261, 7
    %v2263 = vsub.s32 1, %v2262
    %v2264 = vrot.slane %v2255, %v2263
    %v2267 = vadd.f32 %v2198, %v2260
    %v2268 = vadd.f32 %v2199, %v2264
    %v2269 = vadd.f32 %v2200, %v2260
    %v2270 = vadd.f32 %v2201, %v2264
    %v2271 = vmax.f32 %v2267, 0.0
    %v2272 = vmax.f32 %v2268, 0.0
    %v2273 = vmax.f32 %v2269, 0.0
    %v2274 = vmax.f32 %v2270, 0.0
    %v2275 = vadd.f32 %v2251, %v2260
    %v2276 = vadd.f32 %v2252, %v2264
    %v2277 = vadd.f32 %v2253, %v2260
    %v2278 = vadd.f32 %v2254, %v2264
    %v2279 = vmax.f32 %v2275, 0.0
    %v2280 = vmax.f32 %v2276, 0.0
    %v2281 = vmax.f32 %v2277, 0.0
    %v2282 = vmax.f32 %v2278, 0.0
    %v2283 = vmax.f32 %v2271, %v2279
    %v2284 = vmax.f32 %v2272, %v2280
    %v2285 = vmax.f32 %v2273, %v2281
    %v2286 = vmax.f32 %v2274, %v2282
    %v2287 = vmax.f32 %v2283, %v2284
    %v2288 = vmax.f32 %v2285, %v2286
    %v2290 = vrot.slane %v2288, 7
    %vm2292 = vcmask 1040384
    %v2293 = vsel %vm2292, %v2287, %v2290
    %v2295 = vrot.slane %v2287, 1
    %v2297 = vsel %vm2292, %v2295, %v2288
    %v2298 = vrot.slane %v2287, 2
    %v2300 = vrot.slane %v2288, 1
    %v2302 = vsel %vm2292, %v2298, %v2300
    %v2303 = vrot.slane %v2287, 3
    %v2305 = vrot.slane %v2288, 2
    %v2307 = vsel %vm2292, %v2303, %v2305
    %v2308 = vrot.slane %v2287, 4
    %v2310 = vrot.slane %v2288, 3
    %v2312 = vsel %vm2292, %v2308, %v2310
    %v2313 = vpack.c.bf16 %v2293, %v2293
    %v2314 = vpack.c.bf16 %v2297, %v2297
    %v2315 = vpack.c.bf16 %v2302, %v2302
    %v2316 = vpack.c.bf16 %v2307, %v2307
    %v2317 = vpack.c.bf16 %v2312, %v2312
    %v2318 = vld [vmem:[#allocation2] sm:$0xf]
    %v2319 = vld [vmem:[#allocation2 + $0x4] sm:$0xf]
    %v2320 = vld [vmem:[#allocation2 + $0x8] sm:$0xf]
    %v2321 = vld [vmem:[#allocation2 + $0xc] sm:$0xf]
    %v2322 = vld [vmem:[#allocation2 + $0x10] sm:$0xf]
    %v2323 = vld [vmem:[#allocation2 + $0x14] sm:$0xf]
    %v2324 = vld [vmem:[#allocation2 + $0x18] sm:$0xf]
    %v2325 = vld [vmem:[#allocation2 + $0x1c] sm:$0xf]
    %v2326 = vld [vmem:[#allocation2 + $0x20] sm:$0xf]
    %v2327 = vld [vmem:[#allocation2 + $0x24] sm:$0xf]
    %v2328 = vld [vmem:[#allocation2 + $0x28] sm:$0xf]
    %v2329 = vld [vmem:[#allocation2 + $0x2c] sm:$0xf]
    %v2330 = vld [vmem:[#allocation2 + $0x30] sm:$0xf]
    %v2331 = vld [vmem:[#allocation2 + $0x34] sm:$0xf]
    %v2332 = vld [vmem:[#allocation2 + $0x38] sm:$0xf]
    %v2333 = vld [vmem:[#allocation2 + $0x3c] sm:$0xf]
    %v2334 = vld [vmem:[#allocation2 + $0x40] sm:$0xf]
    %v2335 = vld [vmem:[#allocation2 + $0x44] sm:$0xf]
    %v2336 = vld [vmem:[#allocation2 + $0x48] sm:$0xf]
    %v2337 = vld [vmem:[#allocation2 + $0x4c] sm:$0xf]
    %v2338 = vld [vmem:[#allocation2 + $0x50] sm:$0xf]
    %v2339 = vld [vmem:[#allocation2 + $0x54] sm:$0xf]
    %v2340 = vld [vmem:[#allocation2 + $0x58] sm:$0xf]
    %v2341 = vld [vmem:[#allocation2 + $0x5c] sm:$0xf]
    %v2342 = vld [vmem:[#allocation2 + $0x60] sm:$0xf]
    %v2343 = vld [vmem:[#allocation2 + $0x64] sm:$0xf]
    %v2344 = vld [vmem:[#allocation2 + $0x68] sm:$0xf]
    %v2345 = vld [vmem:[#allocation2 + $0x6c] sm:$0xf]
    %v2346 = vld [vmem:[#allocation2 + $0x70] sm:$0xf]
    %v2347 = vld [vmem:[#allocation2 + $0x74] sm:$0xf]
    %v2348 = vld [vmem:[#allocation2 + $0x78] sm:$0xf]
    %v2349 = vld [vmem:[#allocation2 + $0x7c] sm:$0xf]
    %v2350 = vld [vmem:[#allocation2 + $0x80] sm:$0xf]
    %v2351 = vld [vmem:[#allocation2 + $0x84] sm:$0xf]
    %v2352 = vld [vmem:[#allocation2 + $0x88] sm:$0xf]
    %v2353 = vld [vmem:[#allocation2 + $0x8c] sm:$0xf]
    %v2354 = vld [vmem:[#allocation2 + $0x90] sm:$0xf]
    %v2355 = vld [vmem:[#allocation2 + $0x94] sm:$0xf]
    %v2356 = vld [vmem:[#allocation2 + $0x98] sm:$0xf]
    %v2357 = vld [vmem:[#allocation2 + $0x9c] sm:$0xf]
    %v2358 = vld [vmem:[#allocation2 + $0xa0] sm:$0xf]
    %v2359 = vld [vmem:[#allocation2 + $0xa4] sm:$0xf]
    %v2360 = vld [vmem:[#allocation2 + $0xa8] sm:$0xf]
    %v2361 = vld [vmem:[#allocation2 + $0xac] sm:$0xf]
    %v2362 = vld [vmem:[#allocation2 + $0xb0] sm:$0xf]
    %v2363 = vld [vmem:[#allocation2 + $0xb4] sm:$0xf]
    %v2364 = vld [vmem:[#allocation2 + $0xb8] sm:$0xf]
    %v2365 = vld [vmem:[#allocation2 + $0xbc] sm:$0xf]
    %v2366 = vld [vmem:[#allocation2 + $0xc0] sm:$0xf]
    %v2367 = vld [vmem:[#allocation2 + $0xc4] sm:$0xf]
    %v2368 = vld [vmem:[#allocation2 + $0xc8] sm:$0xf]
    %v2369 = vld [vmem:[#allocation2 + $0xcc] sm:$0xf]
    %v2370 = vld [vmem:[#allocation2 + $0xd0] sm:$0xf]
    %v2371 = vld [vmem:[#allocation2 + $0xd4] sm:$0xf]
    %v2372 = vld [vmem:[#allocation2 + $0xd8] sm:$0xf]
    %v2373 = vld [vmem:[#allocation2 + $0xdc] sm:$0xf]
    %v2374 = vld [vmem:[#allocation2 + $0xe0] sm:$0xf]
    %v2375 = vld [vmem:[#allocation2 + $0xe4] sm:$0xf]
    %v2376 = vld [vmem:[#allocation2 + $0xe8] sm:$0xf]
    %v2377 = vld [vmem:[#allocation2 + $0xec] sm:$0xf]
    %v2378 = vld [vmem:[#allocation2 + $0xf0] sm:$0xf]
    %v2379 = vld [vmem:[#allocation2 + $0xf4] sm:$0xf]
    %v2380 = vld [vmem:[#allocation2 + $0xf8] sm:$0xf]
    %v2381 = vld [vmem:[#allocation2 + $0xfc] sm:$0xf]
    %v2382 = vld [vmem:[#allocation2 + $0x100] sm:$0xf]
    %v2383 = vld [vmem:[#allocation2 + $0x104] sm:$0xf]
    %v2384 = vld [vmem:[#allocation2 + $0x108] sm:$0xf]
    %v2385 = vld [vmem:[#allocation2 + $0x10c] sm:$0xf]
    %v2386 = vld [vmem:[#allocation2 + $0x110] sm:$0xf]
    %v2387 = vld [vmem:[#allocation2 + $0x114] sm:$0xf]
    %v2388 = vld [vmem:[#allocation2 + $0x118] sm:$0xf]
    %v2389 = vld [vmem:[#allocation2 + $0x11c] sm:$0xf]
    %v2390 = vld [vmem:[#allocation2 + $0x120] sm:$0xf]
    %v2391 = vld [vmem:[#allocation2 + $0x124] sm:$0xf]
    %v2392 = vld [vmem:[#allocation2 + $0x128] sm:$0xf]
    %v2393 = vld [vmem:[#allocation2 + $0x12c] sm:$0xf]
    %v2394 = vld [vmem:[#allocation2 + $0x130] sm:$0xf]
    %v2395 = vld [vmem:[#allocation2 + $0x134] sm:$0xf]
    %v2396 = vld [vmem:[#allocation2 + $0x138] sm:$0xf]
    %v2397 = vld [vmem:[#allocation2 + $0x13c] sm:$0xf]
    %v2398 = vld [vmem:[%s6] sm:$0x1]
    %v2400 = vlaneseq
    %v2401 = vshrl.u32 %v2400, 7
    %v2402 = vsub.s32 0, %v2401
    %v2403 = vrot.slane %v2398, %v2402
    %v2485 = vunpack.c.l.b16 %v2318
    %v2486 = vunpack.c.l.b16 %v2319
    %v2487 = vunpack.c.l.b16 %v2320
    %v2488 = vunpack.c.l.b16 %v2321
    %v2489 = vunpack.c.l.b16 %v2322
    %v2490 = vunpack.c.l.b16 %v2323
    %v2491 = vunpack.c.l.b16 %v2324
    %v2492 = vunpack.c.l.b16 %v2325
    %v2493 = vunpack.c.l.b16 %v2326
    %v2494 = vunpack.c.l.b16 %v2327
    %v2495 = vunpack.c.l.b16 %v2328
    %v2496 = vunpack.c.l.b16 %v2329
    %v2497 = vunpack.c.l.b16 %v2330
    %v2498 = vunpack.c.l.b16 %v2331
    %v2499 = vunpack.c.l.b16 %v2332
    %v2500 = vunpack.c.l.b16 %v2333
    %v2501 = vunpack.c.l.b16 %v2334
    %v2502 = vunpack.c.l.b16 %v2335
    %v2503 = vunpack.c.l.b16 %v2336
    %v2504 = vunpack.c.l.b16 %v2337
    %v2505 = vunpack.c.l.b16 %v2338
    %v2506 = vunpack.c.l.b16 %v2339
    %v2507 = vunpack.c.l.b16 %v2340
    %v2508 = vunpack.c.l.b16 %v2341
    %v2509 = vunpack.c.l.b16 %v2342
    %v2510 = vunpack.c.l.b16 %v2343
    %v2511 = vunpack.c.l.b16 %v2344
    %v2512 = vunpack.c.l.b16 %v2345
    %v2513 = vunpack.c.l.b16 %v2346
    %v2514 = vunpack.c.l.b16 %v2347
    %v2515 = vunpack.c.l.b16 %v2348
    %v2516 = vunpack.c.l.b16 %v2349
    %v2517 = vunpack.c.l.b16 %v2350
    %v2518 = vunpack.c.l.b16 %v2351
    %v2519 = vunpack.c.l.b16 %v2352
    %v2520 = vunpack.c.l.b16 %v2353
    %v2521 = vunpack.c.l.b16 %v2354
    %v2522 = vunpack.c.l.b16 %v2355
    %v2523 = vunpack.c.l.b16 %v2356
    %v2524 = vunpack.c.l.b16 %v2357
    %v2525 = vunpack.c.l.b16 %v2358
    %v2526 = vunpack.c.l.b16 %v2359
    %v2527 = vunpack.c.l.b16 %v2360
    %v2528 = vunpack.c.l.b16 %v2361
    %v2529 = vunpack.c.l.b16 %v2362
    %v2530 = vunpack.c.l.b16 %v2363
    %v2531 = vunpack.c.l.b16 %v2364
    %v2532 = vunpack.c.l.b16 %v2365
    %v2533 = vunpack.c.l.b16 %v2366
    %v2534 = vunpack.c.l.b16 %v2367
    %v2535 = vunpack.c.l.b16 %v2368
    %v2536 = vunpack.c.l.b16 %v2369
    %v2537 = vunpack.c.l.b16 %v2370
    %v2538 = vunpack.c.l.b16 %v2371
    %v2539 = vunpack.c.l.b16 %v2372
    %v2540 = vunpack.c.l.b16 %v2373
    %v2541 = vunpack.c.l.b16 %v2374
    %v2542 = vunpack.c.l.b16 %v2375
    %v2543 = vunpack.c.l.b16 %v2376
    %v2544 = vunpack.c.l.b16 %v2377
    %v2545 = vunpack.c.l.b16 %v2378
    %v2546 = vunpack.c.l.b16 %v2379
    %v2547 = vunpack.c.l.b16 %v2380
    %v2548 = vunpack.c.l.b16 %v2381
    %v2549 = vunpack.c.l.b16 %v2382
    %v2550 = vunpack.c.l.b16 %v2383
    %v2551 = vunpack.c.l.b16 %v2384
    %v2552 = vunpack.c.l.b16 %v2385
    %v2553 = vunpack.c.l.b16 %v2386
    %v2554 = vunpack.c.l.b16 %v2387
    %v2555 = vunpack.c.l.b16 %v2388
    %v2556 = vunpack.c.l.b16 %v2389
    %v2557 = vunpack.c.l.b16 %v2390
    %v2558 = vunpack.c.l.b16 %v2391
    %v2559 = vunpack.c.l.b16 %v2392
    %v2560 = vunpack.c.l.b16 %v2393
    %v2561 = vunpack.c.l.b16 %v2394
    %v2562 = vunpack.c.l.b16 %v2395
    %v2563 = vunpack.c.l.b16 %v2396
    %v2564 = vunpack.c.l.b16 %v2397
    %v2565 = vpack.c.b16 %v2486, %v2485
    %v2566 = vpack.c.b16 %v2488, %v2487
    %v2567 = vpack.c.b16 %v2490, %v2489
    %v2568 = vpack.c.b16 %v2492, %v2491
    %v2569 = vpack.c.b16 %v2494, %v2493
    %v2570 = vpack.c.b16 %v2496, %v2495
    %v2571 = vpack.c.b16 %v2498, %v2497
    %v2572 = vpack.c.b16 %v2500, %v2499
    %v2573 = vpack.c.b16 %v2502, %v2501
    %v2574 = vpack.c.b16 %v2504, %v2503
    %v2575 = vpack.c.b16 %v2506, %v2505
    %v2576 = vpack.c.b16 %v2508, %v2507
    %v2577 = vpack.c.b16 %v2510, %v2509
    %v2578 = vpack.c.b16 %v2512, %v2511
    %v2579 = vpack.c.b16 %v2514, %v2513
    %v2580 = vpack.c.b16 %v2516, %v2515
    %v2581 = vpack.c.b16 %v2518, %v2517
    %v2582 = vpack.c.b16 %v2520, %v2519
    %v2583 = vpack.c.b16 %v2522, %v2521
    %v2584 = vpack.c.b16 %v2524, %v2523
    %v2585 = vpack.c.b16 %v2526, %v2525
    %v2586 = vpack.c.b16 %v2528, %v2527
    %v2587 = vpack.c.b16 %v2530, %v2529
    %v2588 = vpack.c.b16 %v2532, %v2531
    %v2589 = vpack.c.b16 %v2534, %v2533
    %v2590 = vpack.c.b16 %v2536, %v2535
    %v2591 = vpack.c.b16 %v2538, %v2537
    %v2592 = vpack.c.b16 %v2540, %v2539
    %v2593 = vpack.c.b16 %v2542, %v2541
    %v2594 = vpack.c.b16 %v2544, %v2543
    %v2595 = vpack.c.b16 %v2546, %v2545
    %v2596 = vpack.c.b16 %v2548, %v2547
    %v2597 = vpack.c.b16 %v2550, %v2549
    %v2598 = vpack.c.b16 %v2552, %v2551
    %v2599 = vpack.c.b16 %v2554, %v2553
    %v2600 = vpack.c.b16 %v2556, %v2555
    %v2601 = vpack.c.b16 %v2558, %v2557
    %v2602 = vpack.c.b16 %v2560, %v2559
    %v2603 = vpack.c.b16 %v2562, %v2561
    %v2604 = vpack.c.b16 %v2564, %v2563
    %2645 = vmatprep.subr.bf16.mxu0 0
    %2646 = vmatpush1.bf16.msra.mxu0 %v2572
    %2647 = vmatprep.subr.bf16.mxu0 0
    %2648 = vmatpush1.bf16.msra.mxu0 %v2571
    %2649 = vmatprep.subr.bf16.mxu0 0
    %2650 = vmatpush1.bf16.msra.mxu0 %v2570
    %2651 = vmatprep.subr.bf16.mxu0 0
    %2652 = vmatpush1.bf16.msra.mxu0 %v2569
    %2653 = vmatprep.subr.bf16.mxu0 0
    %2654 = vmatpush1.bf16.msra.mxu0 %v2568
    %2655 = vmatprep.subr.bf16.mxu0 0
    %2656 = vmatpush1.bf16.msra.mxu0 %v2567
    %2657 = vmatprep.subr.bf16.mxu0 0
    %2658 = vmatpush1.bf16.msra.mxu0 %v2566
    %2659 = vmatprep.subr.bf16.mxu0 0
    %2660 = vmatpush1.bf16.msra.mxu0 %v2565
    %2661 = vmatprep.subr.bf16.mxu0 0
    %2662 = vmatpush2.bf16.msra.mxu0 %v2580
    %2663 = vmatprep.subr.bf16.mxu0 0
    %2664 = vmatpush2.bf16.msra.mxu0 %v2579
    %2665 = vmatprep.subr.bf16.mxu0 0
    %2666 = vmatpush2.bf16.msra.mxu0 %v2578
    %2667 = vmatprep.subr.bf16.mxu0 0
    %2668 = vmatpush2.bf16.msra.mxu0 %v2577
    %2669 = vmatprep.subr.bf16.mxu0 0
    %2670 = vmatpush2.bf16.msra.mxu0 %v2576
    %2671 = vmatprep.subr.bf16.mxu0 0
    %2672 = vmatpush2.bf16.msra.mxu0 %v2575
    %2673 = vmatprep.subr.bf16.mxu0 0
    %2674 = vmatpush2.bf16.msra.mxu0 %v2574
    %2675 = vmatprep.subr.bf16.mxu0 0
    %2676 = vmatpush2.bf16.msra.mxu0 %v2573
    %2677 = vmatprep.mubr.bf16.mxu0 %v2314
    %2678 = vmatmul.mubr.bf16.gmra.mxu0 %v2313
    %v2679 = vpop.f32.mrf.mxu0
    %v2680 = vadd.f32 %v2403, %v2679
    %v2681 = vpop.f32.mrf.mxu0
    %v2682 = vpop.f32.mrf.mxu0
    %v2683 = vpop.f32.mrf.mxu0
    %2684 = vdwg.mxu0
    %2685 = vmatprep.subr.bf16.mxu0 0
    %2686 = vmatpush1.bf16.msra.mxu0 %v2588
    %2687 = vmatprep.subr.bf16.mxu0 0
    %2688 = vmatpush1.bf16.msra.mxu0 %v2587
    %2689 = vmatprep.subr.bf16.mxu0 0
    %2690 = vmatpush1.bf16.msra.mxu0 %v2586
    %2691 = vmatprep.subr.bf16.mxu0 0
    %2692 = vmatpush1.bf16.msra.mxu0 %v2585
    %2693 = vmatprep.subr.bf16.mxu0 0
    %2694 = vmatpush1.bf16.msra.mxu0 %v2584
    %2695 = vmatprep.subr.bf16.mxu0 0
    %2696 = vmatpush1.bf16.msra.mxu0 %v2583
    %2697 = vmatprep.subr.bf16.mxu0 0
    %2698 = vmatpush1.bf16.msra.mxu0 %v2582
    %2699 = vmatprep.subr.bf16.mxu0 0
    %2700 = vmatpush1.bf16.msra.mxu0 %v2581
    %2701 = vmatprep.subr.bf16.mxu0 0
    %2702 = vmatpush2.bf16.msra.mxu0 %v2596
    %2703 = vmatprep.subr.bf16.mxu0 0
    %2704 = vmatpush2.bf16.msra.mxu0 %v2595
    %2705 = vmatprep.subr.bf16.mxu0 0
    %2706 = vmatpush2.bf16.msra.mxu0 %v2594
    %2707 = vmatprep.subr.bf16.mxu0 0
    %2708 = vmatpush2.bf16.msra.mxu0 %v2593
    %2709 = vmatprep.subr.bf16.mxu0 0
    %2710 = vmatpush2.bf16.msra.mxu0 %v2592
    %2711 = vmatprep.subr.bf16.mxu0 0
    %2712 = vmatpush2.bf16.msra.mxu0 %v2591
    %2713 = vmatprep.subr.bf16.mxu0 0
    %2714 = vmatpush2.bf16.msra.mxu0 %v2590
    %2715 = vmatprep.subr.bf16.mxu0 0
    %2716 = vmatpush2.bf16.msra.mxu0 %v2589
    %2717 = vmatprep.mubr.bf16.mxu0 %v2316
    %2718 = vmatmul.mubr.bf16.gmra.mxu0 %v2315
    %v2719 = vpop.f32.mrf.mxu0
    %v2720 = vadd.f32 %v2680, %v2719
    %v2721 = vpop.f32.mrf.mxu0
    %v2722 = vpop.f32.mrf.mxu0
    %v2723 = vpop.f32.mrf.mxu0
    %2724 = vdwg.mxu0
    %2725 = vmatprep.subr.bf16.mxu0 0
    %2726 = vmatpush1.bf16.msra.mxu0 %v2604
    %2727 = vmatprep.subr.bf16.mxu0 0
    %2728 = vmatpush1.bf16.msra.mxu0 %v2603
    %2729 = vmatprep.subr.bf16.mxu0 0
    %2730 = vmatpush1.bf16.msra.mxu0 %v2602
    %2731 = vmatprep.subr.bf16.mxu0 0
    %2732 = vmatpush1.bf16.msra.mxu0 %v2601
    %2733 = vmatprep.subr.bf16.mxu0 0
    %2734 = vmatpush1.bf16.msra.mxu0 %v2600
    %2735 = vmatprep.subr.bf16.mxu0 0
    %2736 = vmatpush1.bf16.msra.mxu0 %v2599
    %2737 = vmatprep.subr.bf16.mxu0 0
    %2738 = vmatpush1.bf16.msra.mxu0 %v2598
    %2739 = vmatprep.subr.bf16.mxu0 0
    %2740 = vmatpush1.bf16.msra.mxu0 %v2597
    %2741 = vmatprep.subr.bf16.mxu0 0
    %2742 = vmatpush2.bf16.msra.mxu0 0
    %2743 = vmatprep.subr.bf16.mxu0 0
    %2744 = vmatpush2.bf16.msra.mxu0 0
    %2745 = vmatprep.subr.bf16.mxu0 0
    %2746 = vmatpush2.bf16.msra.mxu0 0
    %2747 = vmatprep.subr.bf16.mxu0 0
    %2748 = vmatpush2.bf16.msra.mxu0 0
    %2749 = vmatprep.subr.bf16.mxu0 0
    %2750 = vmatpush2.bf16.msra.mxu0 0
    %2751 = vmatprep.subr.bf16.mxu0 0
    %2752 = vmatpush2.bf16.msra.mxu0 0
    %2753 = vmatprep.subr.bf16.mxu0 0
    %2754 = vmatpush2.bf16.msra.mxu0 0
    %2755 = vmatprep.subr.bf16.mxu0 0
    %2756 = vmatpush2.bf16.msra.mxu0 0
    %2757 = vmatprep.mubr.bf16.mxu0 0
    %2758 = vmatmul.mubr.bf16.gmra.mxu0 %v2317
    %v2759 = vpop.f32.mrf.mxu0
    %v2760 = vadd.f32 %v2720, %v2759
    %v2761 = vpop.f32.mrf.mxu0
    %v2762 = vpop.f32.mrf.mxu0
    %v2763 = vpop.f32.mrf.mxu0
    %2764 = vdwg.mxu0
    %v2765 = vmax.f32 %v2760, 0.0
    %v2766 = vpack.c.bf16 %v2765, %v2765
    %v2767 = vld [vmem:[%s7] sm:$0xf]
    %v2768 = vld [vmem:[%s7 + $0x4] sm:$0xf]
    %v2769 = vld [vmem:[%s7 + $0x8] sm:$0xf]
    %v2770 = vld [vmem:[%s7 + $0xc] sm:$0xf]
    %v2771 = vld [vmem:[%s7 + $0x10] sm:$0xf]
    %v2772 = vld [vmem:[%s7 + $0x14] sm:$0xf]
    %v2773 = vld [vmem:[%s7 + $0x18] sm:$0xf]
    %v2774 = vld [vmem:[%s7 + $0x1c] sm:$0xf]
    %v2775 = vld [vmem:[%s7 + $0x20] sm:$0xf]
    %v2776 = vld [vmem:[%s7 + $0x24] sm:$0xf]
    %v2777 = vld [vmem:[%s7 + $0x28] sm:$0xf]
    %v2778 = vld [vmem:[%s7 + $0x2c] sm:$0xf]
    %v2779 = vld [vmem:[%s7 + $0x30] sm:$0xf]
    %v2780 = vld [vmem:[%s7 + $0x34] sm:$0xf]
    %v2781 = vld [vmem:[%s7 + $0x38] sm:$0xf]
    %v2782 = vld [vmem:[%s7 + $0x3c] sm:$0xf]
    %v2783 = vld [vmem:[%s8] sm:$0x1]
    %v2785 = vlaneseq
    %v2786 = vshrl.u32 %v2785, 7
    %v2787 = vsub.s32 0, %v2786
    %v2788 = vrot.slane %v2783, %v2787
    %v2806 = vunpack.c.l.b16 %v2767
    %v2807 = vunpack.c.l.b16 %v2768
    %v2808 = vunpack.c.l.b16 %v2769
    %v2809 = vunpack.c.l.b16 %v2770
    %v2810 = vunpack.c.l.b16 %v2771
    %v2811 = vunpack.c.l.b16 %v2772
    %v2812 = vunpack.c.l.b16 %v2773
    %v2813 = vunpack.c.l.b16 %v2774
    %v2814 = vunpack.c.l.b16 %v2775
    %v2815 = vunpack.c.l.b16 %v2776
    %v2816 = vunpack.c.l.b16 %v2777
    %v2817 = vunpack.c.l.b16 %v2778
    %v2818 = vunpack.c.l.b16 %v2779
    %v2819 = vunpack.c.l.b16 %v2780
    %v2820 = vunpack.c.l.b16 %v2781
    %v2821 = vunpack.c.l.b16 %v2782
    %v2822 = vpack.c.b16 %v2807, %v2806
    %v2823 = vpack.c.b16 %v2809, %v2808
    %v2824 = vpack.c.b16 %v2811, %v2810
    %v2825 = vpack.c.b16 %v2813, %v2812
    %v2826 = vpack.c.b16 %v2815, %v2814
    %v2827 = vpack.c.b16 %v2817, %v2816
    %v2828 = vpack.c.b16 %v2819, %v2818
    %v2829 = vpack.c.b16 %v2821, %v2820
    %2838 = vmatprep.subr.bf16.mxu0 0
    %2839 = vmatpush1.bf16.msra.mxu0 %v2829
    %2840 = vmatprep.subr.bf16.mxu0 0
    %2841 = vmatpush1.bf16.msra.mxu0 %v2828
    %2842 = vmatprep.subr.bf16.mxu0 0
    %2843 = vmatpush1.bf16.msra.mxu0 %v2827
    %2844 = vmatprep.subr.bf16.mxu0 0
    %2845 = vmatpush1.bf16.msra.mxu0 %v2826
    %2846 = vmatprep.subr.bf16.mxu0 0
    %2847 = vmatpush1.bf16.msra.mxu0 %v2825
    %2848 = vmatprep.subr.bf16.mxu0 0
    %2849 = vmatpush1.bf16.msra.mxu0 %v2824
    %2850 = vmatprep.subr.bf16.mxu0 0
    %2851 = vmatpush1.bf16.msra.mxu0 %v2823
    %2852 = vmatprep.subr.bf16.mxu0 0
    %2853 = vmatpush1.bf16.msra.mxu0 %v2822
    %2854 = vmatprep.subr.bf16.mxu0 0
    %2855 = vmatpush2.bf16.msra.mxu0 0
    %2856 = vmatprep.subr.bf16.mxu0 0
    %2857 = vmatpush2.bf16.msra.mxu0 0
    %2858 = vmatprep.subr.bf16.mxu0 0
    %2859 = vmatpush2.bf16.msra.mxu0 0
    %2860 = vmatprep.subr.bf16.mxu0 0
    %2861 = vmatpush2.bf16.msra.mxu0 0
    %2862 = vmatprep.subr.bf16.mxu0 0
    %2863 = vmatpush2.bf16.msra.mxu0 0
    %2864 = vmatprep.subr.bf16.mxu0 0
    %2865 = vmatpush2.bf16.msra.mxu0 0
    %2866 = vmatprep.subr.bf16.mxu0 0
    %2867 = vmatpush2.bf16.msra.mxu0 0
    %2868 = vmatprep.subr.bf16.mxu0 0
    %2869 = vmatpush2.bf16.msra.mxu0 0
    %2870 = vmatprep.mubr.bf16.mxu0 0
    %2871 = vmatmul.mubr.bf16.gmra.mxu0 %v2766
    %v2872 = vpop.f32.mrf.mxu0
    %v2873 = vadd.f32 %v2788, %v2872
    %v2874 = vpop.f32.mrf.mxu0
    %v2875 = vpop.f32.mrf.mxu0
    %v2876 = vpop.f32.mrf.mxu0
    %2877 = vdwg.mxu0
    %v2878 = vmax.f32 %v2873, 0.0
    %v2879 = vpack.c.bf16 %v2878, %v2878
    %v2880 = vld [vmem:[%s9] sm:$0xf]
    %v2881 = vld [vmem:[%s9 + $0x4] sm:$0xf]
    %v2882 = vld [vmem:[%s9 + $0x8] sm:$0xf]
    %v2883 = vld [vmem:[%s9 + $0xc] sm:$0xf]
    %v2884 = vld [vmem:[%s9 + $0x10] sm:$0xf]
    %v2885 = vld [vmem:[%s9 + $0x14] sm:$0xf]
    %v2886 = vld [vmem:[%s9 + $0x18] sm:$0xf]
    %v2887 = vld [vmem:[%s9 + $0x1c] sm:$0xf]
    %v2888 = vld [vmem:[%s9 + $0x20] sm:$0xf]
    %v2889 = vld [vmem:[%s9 + $0x24] sm:$0xf]
    %v2890 = vld [vmem:[%s9 + $0x28] sm:$0xf]
    %v2891 = vld [vmem:[%s9 + $0x2c] sm:$0xf]
    %v2892 = vld [vmem:[%s9 + $0x30] sm:$0xf]
    %v2893 = vld [vmem:[%s9 + $0x34] sm:$0xf]
    %v2894 = vld [vmem:[%s9 + $0x38] sm:$0xf]
    %v2895 = vld [vmem:[%s9 + $0x3c] sm:$0xf]
    %v2896 = vld [vmem:[%s10] sm:$0x1]
    %v2898 = vlaneseq
    %v2899 = vshrl.u32 %v2898, 7
    %v2900 = vsub.s32 0, %v2899
    %v2901 = vrot.slane %v2896, %v2900
    %v2919 = vunpack.c.l.b16 %v2880
    %v2920 = vunpack.c.l.b16 %v2881
    %v2921 = vunpack.c.l.b16 %v2882
    %v2922 = vunpack.c.l.b16 %v2883
    %v2923 = vunpack.c.l.b16 %v2884
    %v2924 = vunpack.c.l.b16 %v2885
    %v2925 = vunpack.c.l.b16 %v2886
    %v2926 = vunpack.c.l.b16 %v2887
    %v2927 = vunpack.c.l.b16 %v2888
    %v2928 = vunpack.c.l.b16 %v2889
    %v2929 = vunpack.c.l.b16 %v2890
    %v2930 = vunpack.c.l.b16 %v2891
    %v2931 = vunpack.c.l.b16 %v2892
    %v2932 = vunpack.c.l.b16 %v2893
    %v2933 = vunpack.c.l.b16 %v2894
    %v2934 = vunpack.c.l.b16 %v2895
    %v2935 = vpack.c.b16 %v2920, %v2919
    %v2936 = vpack.c.b16 %v2922, %v2921
    %v2937 = vpack.c.b16 %v2924, %v2923
    %v2938 = vpack.c.b16 %v2926, %v2925
    %v2939 = vpack.c.b16 %v2928, %v2927
    %v2940 = vpack.c.b16 %v2930, %v2929
    %v2941 = vpack.c.b16 %v2932, %v2931
    %v2942 = vpack.c.b16 %v2934, %v2933
    %2951 = vmatprep.subr.bf16.mxu0 0
    %2952 = vmatpush1.bf16.msra.mxu0 %v2942
    %2953 = vmatprep.subr.bf16.mxu0 0
    %2954 = vmatpush1.bf16.msra.mxu0 %v2941
    %2955 = vmatprep.subr.bf16.mxu0 0
    %2956 = vmatpush1.bf16.msra.mxu0 %v2940
    %2957 = vmatprep.subr.bf16.mxu0 0
    %2958 = vmatpush1.bf16.msra.mxu0 %v2939
    %2959 = vmatprep.subr.bf16.mxu0 0
    %2960 = vmatpush1.bf16.msra.mxu0 %v2938
    %2961 = vmatprep.subr.bf16.mxu0 0
    %2962 = vmatpush1.bf16.msra.mxu0 %v2937
    %2963 = vmatprep.subr.bf16.mxu0 0
    %2964 = vmatpush1.bf16.msra.mxu0 %v2936
    %2965 = vmatprep.subr.bf16.mxu0 0
    %2966 = vmatpush1.bf16.msra.mxu0 %v2935
    %2967 = vmatprep.subr.bf16.mxu0 0
    %2968 = vmatpush2.bf16.msra.mxu0 0
    %2969 = vmatprep.subr.bf16.mxu0 0
    %2970 = vmatpush2.bf16.msra.mxu0 0
    %2971 = vmatprep.subr.bf16.mxu0 0
    %2972 = vmatpush2.bf16.msra.mxu0 0
    %2973 = vmatprep.subr.bf16.mxu0 0
    %2974 = vmatpush2.bf16.msra.mxu0 0
    %2975 = vmatprep.subr.bf16.mxu0 0
    %2976 = vmatpush2.bf16.msra.mxu0 0
    %2977 = vmatprep.subr.bf16.mxu0 0
    %2978 = vmatpush2.bf16.msra.mxu0 0
    %2979 = vmatprep.subr.bf16.mxu0 0
    %2980 = vmatpush2.bf16.msra.mxu0 0
    %2981 = vmatprep.subr.bf16.mxu0 0
    %2982 = vmatpush2.bf16.msra.mxu0 0
    %2983 = vmatprep.mubr.bf16.mxu0 0
    %2984 = vmatmul.mubr.bf16.gmra.mxu0 %v2879
    %v2985 = vpop.f32.mrf.mxu0
    %v2986 = vadd.f32 %v2901, %v2985
    %v2987 = vpop.f32.mrf.mxu0
    %v2988 = vpop.f32.mrf.mxu0
    %v2989 = vpop.f32.mrf.mxu0
    %2990 = vdwg.mxu0
    %v2991 = vmax.f32 %v2986, 0.0
    %vm2992 = vcmask 74752
    %2993 = vst.msk [vmem:[#allocation5] sm:$0x3] %vm2992, %v2991
    // Predicated region
    $region50: #{net_forward.1} parent=1 // pred_check
      _
    $region51: #{net_forward.1} parent=1 // pred_check_branch
      %2995 = sbr.rel (0) target = $region53
    $region52: #{net_forward.1} parent=1 // pred_region
      %s2997 = ssub.s32 32, 32
      %2998 = vsyncadd [#allocation4], %s2997
      %s3000 = sshll.u32 [#allocation5], 4
      %s3001 = int_to_ptr.vmem [resolvable:$true] %s3000
      %3003 = dma.vmem_to_hbm [thread:$0]  %s3001, 32, %s11, [#allocation4]
    $region53: #{net_forward.1} parent=1 // pred_fallthru
      _
    // Predicated region
    $region54: #{net_forward.1} parent=1 // pred_check
      _
    $region55: #{net_forward.1} parent=1 // pred_check_branch
      %3005 = sbr.rel (0) target = $region57
    $region56: #{net_forward.1} parent=1 // pred_region
      %3006 = dma.done [#allocation4], 32
    $region57: #{net_forward.1} parent=1 // pred_fallthru
      _
    %3007 = vsyncpa [#allocation3], 1
    %3008 = vsyncpa [#allocation4], 1

</llo_original>
